<compile_context>
chip_gen: v6e
topology: v6e:2x2x1
jax: 0.10.0
libtpu: 0.0.40
codegen_flags: <defaults>
</compile_context>

<pallas_src>
import functools

import jax
import jax.numpy as jnp
from jax.experimental import pallas as pl
from jax.experimental.pallas import tpu as pltpu

# Hyperparameters referenced by the PyTorch module's __init__.
hyperparams = {
    "hidden_layer_size": 32,   # fc1 output size / GRU input size
    "lstm_hidden_size": 32,    # GRU hidden size
    "lstm_num_layers": 2,      # stacked GRU layers
}

_LANES = 128


def _slab_layout(P, HID, GH, NL, A):
    """Static (row, col) offsets of every weight block in the packed slab.

    fc1 is the backbone (rows 0:32*P, lanes 0:HID); all other blocks are
    co-located in lanes HID:128 of those same rows (review item 3).
    """
    assert HID == GH, "stacked GRU layers share one weight-block shape"
    rows = 32 * P
    col = HID
    assert col + 3 * GH <= _LANES
    assert col + 32 <= _LANES and col + A <= _LANES
    off = {"rows": rows, "fc1": (0, 0)}
    r = 0
    off["gru"] = []
    for _ in range(NL):
        off["gru"].append((r, col))
        r += HID + GH                      # [Wih ; Whh] stacked rows (fused matmul)
    off["conv2"] = (r, col); r += 3 * 16
    off["fc2"] = (r, col); r += GH
    off["conv1"] = (r, col); r += 8        # 3 real tap rows + 5 zero rows
    assert r <= rows, f"packed slab overflow: {r} > {rows}"
    return off


# ---------------------------------------------------------------------------
# Kernel (grid = (T,), weights/biases/h0 VMEM-resident across steps)
# ---------------------------------------------------------------------------
def policy_kernel(x_ref, w_ref, b_ref, h0_ref, probs_ref, hout_ref,
                  *, B, L, HID, GH, NL, A, off):
    f32 = jnp.float32
    P = L // 2
    R = B * L
    t = pl.program_id(0)

    def mm(a, w):  # one bf16 MXU pass, f32 accumulate (w is already bf16)
        return jnp.dot(a.astype(jnp.bfloat16), w, preferred_element_type=f32)

    def relu(a):
        return jnp.maximum(a, 0.0)

    # ---- recurrent state carry: seed the resident output block at t == 0 ---
    @pl.when(t == 0)
    def _():
        hout_ref[...] = h0_ref[...]

    # ---- Conv1d(1 -> 16, k=3, stride=1, pad=1) + ReLU ----------------------
    # im2col to one (R, 8) tap matrix (3 taps + 5 zero lanes so K is a full
    # sublane tile; the matching packed weight rows are zero) -> one matmul.
    x = x_ref[0]                                              # (B, L) f32
    zc = jnp.zeros((B, 1), f32)
    xm1 = jnp.concatenate([zc, x[:, :L - 1]], axis=1)         # x[l-1], 0 at l=0
    xp1 = jnp.concatenate([x[:, 1:], zc], axis=1)             # x[l+1], 0 at l=L-1
    x3 = jnp.concatenate(
        [xm1[:, :, None], x[:, :, None], xp1[:, :, None],
         jnp.zeros((B, L, 5), f32)], axis=2).reshape(R, 8)    # (R, 8), r = b*L + l
    r0, c0 = off["conv1"]
    h1 = relu(mm(x3, w_ref[r0:r0 + 8, c0:c0 + 16])
              + b_ref[0:1, 0:16])                             # (R, 16)

    # ---- Conv1d(16 -> 32, k=3, stride=1, pad=1) + ReLU ---------------------
    # Tap shifts stay on the 2-D (R, 16) tile: one-row shift + iota mask for
    # the per-batch boundaries, then a single lane-concat into a K=48 operand.
    l_idx = jax.lax.broadcasted_iota(jnp.int32, (R, 1), 0) % L
    zrow = jnp.zeros((1, 16), f32)
    h1m = jnp.where(l_idx == 0, 0.0,
                    jnp.concatenate([zrow, h1[:R - 1, :]], axis=0))   # in[l-1]
    h1p = jnp.where(l_idx == L - 1, 0.0,
                    jnp.concatenate([h1[1:, :], zrow], axis=0))       # in[l+1]
    x48 = jnp.concatenate([h1m, h1, h1p], axis=1)             # (R, 48)
    r0, c0 = off["conv2"]
    h2 = relu(mm(x48, w_ref[r0:r0 + 48, c0:c0 + 32])
              + b_ref[1:2, 0:32])                             # (R, 32)

    # ---- MaxPool1d(2) + flatten + fc1 + ReLU -------------------------------
    # Row 2p takes max(row 2p, row 2p+1); only even rows are consumed below,
    # so the pair never crosses a batch boundary.  The packed fc1 rows are
    # ordered p*32 + c, matching the lane order produced here.
    nxt = jnp.concatenate([h2[1:, :], jnp.zeros((1, 32), f32)], axis=0)
    pooled3 = jnp.maximum(h2, nxt).reshape(B, L, 32)
    feat_in = jnp.concatenate([pooled3[:, 2 * p, :] for p in range(P)], axis=1)
    feat = relu(mm(feat_in, w_ref[0:32 * P, 0:HID])
                + b_ref[2:3, 0:HID])                          # (B, HID)

    # ---- GRU: seq_len == 1, NL stacked layers, ONE matmul per layer --------
    # LHS rows 0:B = [seq | 0], rows B:2B = [0 | h_prev]; the packed weight is
    # the row-stacked [Wih ; Whh] so rows 0:B of the product are the input
    # gates gi and rows B:2B the hidden gates gh (r|z|n fused on lanes).
    seq = feat
    for layer in range(NL):
        r0, c0 = off["gru"][layer]
        h_prev = hout_ref[layer]                              # step t-1 (or h0)
        lhs = jnp.concatenate(
            [jnp.concatenate([seq, jnp.zeros((B, GH), f32)], axis=1),
             jnp.concatenate([jnp.zeros((B, HID), f32), h_prev], axis=1)],
            axis=0)                                           # (2B, HID+GH)
        gates = mm(lhs, w_ref[r0:r0 + HID + GH, c0:c0 + 3 * GH])  # (2B, 3GH)
        gi = gates[0:B] + b_ref[3 + 2 * layer:4 + 2 * layer, 0:3 * GH]
        gh = gates[B:2 * B] + b_ref[4 + 2 * layer:5 + 2 * layer, 0:3 * GH]
        r = jax.nn.sigmoid(gi[:, 0:GH] + gh[:, 0:GH])
        z = jax.nn.sigmoid(gi[:, GH:2 * GH] + gh[:, GH:2 * GH])
        n = jnp.tanh(gi[:, 2 * GH:3 * GH] + r * gh[:, 2 * GH:3 * GH])
        h_new = (1.0 - z) * n + z * h_prev
        hout_ref[layer] = h_new                               # carried to step t+1
        seq = h_new                                           # feeds next layer

    # ---- fc2 + softmax (exact reciprocal so probs sum to 1) ----------------
    r0, c0 = off["fc2"]
    logits = mm(seq, w_ref[r0:r0 + GH, c0:c0 + A]) \
        + b_ref[3 + 2 * NL:4 + 2 * NL, 0:A]                   # (B, A)
    e = jnp.exp(logits - jnp.max(logits, axis=-1, keepdims=True))
    probs_ref[0] = e / jnp.sum(e, axis=-1, keepdims=True)


# ---------------------------------------------------------------------------
# Host-side operand packing (layout only, done ONCE at parameter-init time)
# ---------------------------------------------------------------------------
def pack_params(pt):
    """Re-lay-out all weights into one (32*P, 128) bf16 slab + one (8, 128) f32
    bias slab.  Runs once; the packed arrays are reused by every forward call."""
    HID = hyperparams["hidden_layer_size"]
    GH = hyperparams["lstm_hidden_size"]
    NL = hyperparams["lstm_num_layers"]
    A = pt["fc2_w"].shape[0]
    P = pt["fc1_w"].shape[1] // 32
    off = _slab_layout(P, HID, GH, NL, A)

    w = jnp.zeros((off["rows"], _LANES), jnp.float32)

    def put(w, r, c, block):
        block = jnp.asarray(block, jnp.float32)
        return w.at[r:r + block.shape[0], c:c + block.shape[1]].set(block)

    # fc1: PyTorch flatten index c*P + p -> packed row p*32 + c, cols hid.
    w = put(w, 0, 0,
            pt["fc1_w"].reshape(HID, 32, P).transpose(2, 1, 0).reshape(32 * P, HID))
    for layer in range(NL):
        r, c = off["gru"][layer]
        w = put(w, r, c, pt["gru_wih"][layer].T)          # (in, 3GH), cols r|z|n
        w = put(w, r + HID, c, pt["gru_whh"][layer].T)    # (GH, 3GH)
    r, c = off["conv2"]
    # conv2: (out=32, in=16, k=3) -> rows k*16 + cin, cols cout.
    w = put(w, r, c, jnp.transpose(pt["conv2_w"], (2, 1, 0)).reshape(3 * 16, 32))
    r, c = off["fc2"]
    w = put(w, r, c, pt["fc2_w"].T)                       # (GH, A)
    r, c = off["conv1"]
    # conv1: (out=16, in=1, k=3) -> (k, out); rows 3..7 of the block stay zero.
    w = put(w, r, c, pt["conv1_w"][:, 0, :].T)

    def brow(v):
        v = jnp.asarray(v, jnp.float32).reshape(1, -1)
        return jnp.pad(v, ((0, 0), (0, _LANES - v.shape[1])))

    rows = [brow(pt["conv1_b"]), brow(pt["conv2_b"]), brow(pt["fc1_b"])]
    for layer in range(NL):
        rows += [brow(pt["gru_bih"][layer]), brow(pt["gru_bhh"][layer])]
    rows.append(brow(pt["fc2_b"]))
    b = jnp.concatenate(rows, axis=0)
    b = jnp.pad(b, ((0, (-b.shape[0]) % 8), (0, 0)))

    return {"w": w.astype(jnp.bfloat16), "b": b, "action_dim": A,
            "state_dim": 2 * P}


# ---------------------------------------------------------------------------
# Jitted forward (T-step grid; weights stay VMEM-resident across steps)
# ---------------------------------------------------------------------------
@functools.partial(jax.jit, static_argnames=("action_dim",), donate_argnums=(3,))
def _policy_steps(xs, wpack, bpack, h0, *, action_dim):
    T, B, L = xs.shape
    HID = hyperparams["hidden_layer_size"]
    GH = hyperparams["lstm_hidden_size"]
    NL = hyperparams["lstm_num_layers"]
    assert L % 2 == 0
    off = _slab_layout(L // 2, HID, GH, NL, action_dim)

    kernel = functools.partial(policy_kernel, B=B, L=L, HID=HID, GH=GH, NL=NL,
                               A=action_dim, off=off)
    probs, hidden = pl.pallas_call(
        kernel,
        out_shape=(jax.ShapeDtypeStruct((T, B, action_dim), jnp.float32),
                   jax.ShapeDtypeStruct((NL, B, GH), jnp.float32)),
        grid=(T,),
        in_specs=[
            pl.BlockSpec((1, B, L), lambda t: (t, 0, 0)),           # per-step obs
            pl.BlockSpec((off["rows"], _LANES), lambda t: (0, 0)),  # weights: resident
            pl.BlockSpec((bpack.shape[0], _LANES), lambda t: (0, 0)),
            pl.BlockSpec((NL, B, GH), lambda t: (0, 0, 0)),         # h0: resident
        ],
        out_specs=(
            pl.BlockSpec((1, B, action_dim), lambda t: (t, 0, 0)),  # per-step probs
            pl.BlockSpec((NL, B, GH), lambda t: (0, 0, 0)),         # carried hidden
        ),
        input_output_aliases={3: 1},   # h0 buffer reused for the new hidden state
        compiler_params=pltpu.CompilerParams(
            dimension_semantics=("arbitrary",)),
    )(xs, wpack, bpack, h0)
    return probs, hidden


def policy_forward(x, packed, hidden_state=None):
    """Single-step forward: x (B, state_dim) -> (probs (B, A), hidden (NL, B, GH))."""
    B = x.shape[0]
    NL = hyperparams["lstm_num_layers"]
    GH = hyperparams["lstm_hidden_size"]
    if hidden_state is None:
        hidden_state = jnp.zeros((NL, B, GH), jnp.float32)
    probs, hidden = _policy_steps(x.astype(jnp.float32)[None], packed["w"],
                                  packed["b"], hidden_state,
                                  action_dim=packed["action_dim"])
    return probs[0], hidden


def policy_rollout(xs, packed, hidden_state=None):
    """T-step rollout: xs (T, B, state_dim) -> (probs (T, B, A), final hidden)."""
    _, B, _ = xs.shape
    NL = hyperparams["lstm_num_layers"]
    GH = hyperparams["lstm_hidden_size"]
    if hidden_state is None:
        hidden_state = jnp.zeros((NL, B, GH), jnp.float32)
    return _policy_steps(xs.astype(jnp.float32), packed["w"], packed["b"],
                         hidden_state, action_dim=packed["action_dim"])


# ---------------------------------------------------------------------------
# Deterministic synthetic parameters in PyTorch layouts
# ---------------------------------------------------------------------------
def init_params(key, state_dim, action_dim):
    HID = hyperparams["hidden_layer_size"]
    GH = hyperparams["lstm_hidden_size"]
    NL = hyperparams["lstm_num_layers"]
    P = state_dim // 2
    keys = iter(jax.random.split(key, 64))

    def unif(shape, fan_in):
        bound = 1.0 / float(fan_in) ** 0.5
        return jax.random.uniform(next(keys), shape, jnp.float32, -bound, bound)

    pt = {
        "conv1_w": unif((16, 1, 3), 1 * 3),
        "conv1_b": unif((16,), 1 * 3),
        "conv2_w": unif((32, 16, 3), 16 * 3),
        "conv2_b": unif((32,), 16 * 3),
        "fc1_w": unif((HID, 32 * P), 32 * P),
        "fc1_b": unif((HID,), 32 * P),
        "fc2_w": unif((action_dim, GH), GH),
        "fc2_b": unif((action_dim,), GH),
    }
    wih, whh, bih, bhh = [], [], [], []
    for layer in range(NL):
        in_dim = HID if layer == 0 else GH
        wih.append(unif((3 * GH, in_dim), GH))
        whh.append(unif((3 * GH, GH), GH))
        bih.append(unif((3 * GH,), GH))
        bhh.append(unif((3 * GH,), GH))
    pt["gru_wih"] = jnp.stack(wih)
    pt["gru_whh"] = jnp.stack(whh)
    pt["gru_bih"] = jnp.stack(bih)
    pt["gru_bhh"] = jnp.stack(bhh)
    return pt


# ---------------------------------------------------------------------------
# Pure-JAX reference (PyTorch weight layouts, full f32 precision)
# ---------------------------------------------------------------------------
def reference_forward(x, pt, hidden_state=None):
    B, L = x.shape
    GH = hyperparams["lstm_hidden_size"]
    NL = hyperparams["lstm_num_layers"]

    def conv1d_same(inp, w, b):  # inp (B, Cin, L), w (Cout, Cin, 3), pad=1
        pad = jnp.pad(inp, ((0, 0), (0, 0), (1, 1)))
        cols = jnp.stack([pad[:, :, k:k + L] for k in range(3)], axis=-1)
        return (jnp.einsum("bilk,oik->bol", cols, w, precision="highest")
                + b[None, :, None])

    h = jax.nn.relu(conv1d_same(x[:, None, :], pt["conv1_w"], pt["conv1_b"]))
    h = jax.nn.relu(conv1d_same(h, pt["conv2_w"], pt["conv2_b"]))
    h = jnp.max(h.reshape(B, 32, L // 2, 2), axis=-1)          # MaxPool1d(2)
    flat = h.reshape(B, -1)
    f = jax.nn.relu(jnp.einsum("bi,hi->bh", flat, pt["fc1_w"],
                               precision="highest") + pt["fc1_b"])
    h_all = (hidden_state if hidden_state is not None
             else jnp.zeros((NL, B, GH), jnp.float32))
    inp, houts = f, []
    for layer in range(NL):
        hp = h_all[layer]
        gi = jnp.einsum("bi,gi->bg", inp, pt["gru_wih"][layer],
                        precision="highest") + pt["gru_bih"][layer]
        gh = jnp.einsum("bi,gi->bg", hp, pt["gru_whh"][layer],
                        precision="highest") + pt["gru_bhh"][layer]
        r = jax.nn.sigmoid(gi[:, :GH] + gh[:, :GH])
        z = jax.nn.sigmoid(gi[:, GH:2 * GH] + gh[:, GH:2 * GH])
        n = jnp.tanh(gi[:, 2 * GH:] + r * gh[:, 2 * GH:])
        hn = (1.0 - z) * n + z * hp
        houts.append(hn)
        inp = hn
    logits = jnp.einsum("bi,ai->ba", inp, pt["fc2_w"],
                        precision="highest") + pt["fc2_b"]
    return jax.nn.softmax(logits, axis=-1), jnp.stack(houts, axis=0)


if __name__ == "__main__":
    STATE_DIM, ACTION_DIM, BATCH = 16, 4, 2
    root = jax.random.PRNGKey(0)
    k_params, k_x1, k_x2, k_x3 = jax.random.split(root, 4)
    params = init_params(k_params, STATE_DIM, ACTION_DIM)
    packed = pack_params(params)            # packed ONCE (review item 1)
    NL = hyperparams["lstm_num_layers"]
    GH = hyperparams["lstm_hidden_size"]

    # Tolerances: the kernel runs single-pass bf16 MXU matmuls (bf16 weights,
    # bf16-cast activations, f32 accumulate) while the reference is full f32.
    ATOL, RTOL = 1e-2, 1e-2

    # Step 1: hidden_state=None path.
    x1 = jax.random.normal(k_x1, (BATCH, STATE_DIM), jnp.float32)
    probs1, hidden1 = jax.block_until_ready(policy_forward(x1, packed))
    ref_probs1, ref_hidden1 = reference_forward(x1, params)
    assert probs1.shape == (BATCH, ACTION_DIM)
    assert hidden1.shape == (NL, BATCH, GH)
    assert bool(jnp.allclose(jnp.sum(probs1, axis=-1), 1.0, atol=1e-5))
    assert bool(jnp.allclose(probs1, ref_probs1, atol=ATOL, rtol=RTOL))
    assert bool(jnp.allclose(hidden1, ref_hidden1, atol=ATOL, rtol=RTOL))

    # Step 2: thread the recurrent state back in (exercises the donated /
    # aliased h0 -> hidden buffer used by RL rollout loops).
    x2 = jax.random.normal(k_x2, (BATCH, STATE_DIM), jnp.float32)
    ref_probs2, ref_hidden2 = reference_forward(x2, params, hidden1)
    probs2, hidden2 = jax.block_until_ready(policy_forward(x2, packed, hidden1))
    assert bool(jnp.allclose(probs2, ref_probs2, atol=ATOL, rtol=RTOL))
    assert bool(jnp.allclose(hidden2, ref_hidden2, atol=ATOL, rtol=RTOL))

    # Step 3: fused T-step rollout (weights DMA'd once, hidden carried in the
    # resident output block across the grid).
    T = 4
    xs = jax.random.normal(k_x3, (T, BATCH, STATE_DIM), jnp.float32)
    roll_probs, roll_hidden = jax.block_until_ready(policy_rollout(xs, packed))
    ref_h = None
    for step in range(T):
        ref_p, ref_h = reference_forward(xs[step], params, ref_h)
        assert bool(jnp.allclose(roll_probs[step], ref_p, atol=2e-2, rtol=2e-2))
    assert bool(jnp.allclose(roll_hidden, ref_h, atol=2e-2, rtol=2e-2))

    print("KERNEL_OK")
</pallas_src>

<mosaic_0001>
module attributes {stable_mosaic.version = 11 : i64} {
  func.func @policy_kernel(%arg0: i32, %arg1: memref<1x2x16xf32, #tpu.memory_space<vmem>>, %arg2: memref<256x128xbf16, #tpu.memory_space<vmem>>, %arg3: memref<8x128xf32, #tpu.memory_space<vmem>>, %arg4: memref<2x2x32xf32, #tpu.memory_space<vmem>>, %arg5: memref<1x2x4xf32, #tpu.memory_space<vmem>>, %arg6: memref<2x2x32xf32, #tpu.memory_space<vmem>>) attributes {dimension_semantics = [#tpu.dimension_semantics<arbitrary>], iteration_bounds = array<i64: 1>, scalar_prefetch = 0 : i64, scratch_operands = 0 : i64, tpu.core_type = #tpu.core_type<tc>, window_params = [{transform_indices = @transform_0, window_bounds = array<i64: 1, 2, 16>}, {pipeline_mode = #tpu.pipeline_mode<synchronous>, transform_indices = @transform_1, window_bounds = array<i64: 256, 128>}, {pipeline_mode = #tpu.pipeline_mode<synchronous>, transform_indices = @transform_2, window_bounds = array<i64: 8, 128>}, {pipeline_mode = #tpu.pipeline_mode<synchronous>, transform_indices = @transform_3, window_bounds = array<i64: 2, 2, 32>}, {transform_indices = @transform_4, window_bounds = array<i64: 1, 2, 4>}, {pipeline_mode = #tpu.pipeline_mode<synchronous>, transform_indices = @transform_5, window_bounds = array<i64: 2, 2, 32>}]} {
    %c0_i32 = arith.constant 0 : i32
    %0 = arith.cmpi eq, %arg0, %c0_i32 : i32
    %1 = arith.extui %0 : i1 to i32
    %c0_i32_0 = arith.constant 0 : i32
    %2 = arith.cmpi ne, %1, %c0_i32_0 : i32
    scf.if %2 {
      %c0_65 = arith.constant 0 : index
      %c0_66 = arith.constant 0 : index
      %c0_67 = arith.constant 0 : index
      %209 = vector.load %arg4[%c0_65, %c0_66, %c0_67] : memref<2x2x32xf32, #tpu.memory_space<vmem>>, vector<2x2x32xf32>
      %c0_68 = arith.constant 0 : index
      %c0_69 = arith.constant 0 : index
      %c0_70 = arith.constant 0 : index
      %210 = vector.load %arg6[%c0_68, %c0_69, %c0_70] : memref<2x2x32xf32, #tpu.memory_space<vmem>>, vector<2x2x32xf32>
      tpu.vector_store %arg6[%c0_68, %c0_69, %c0_70], %209 {strides = array<i32>} : memref<2x2x32xf32, #tpu.memory_space<vmem>>, vector<2x2x32xf32>,
    } else {
    }
    %c0 = arith.constant 0 : index
    %c0_1 = arith.constant 0 : index
    %c0_2 = arith.constant 0 : index
    %3 = vector.load %arg1[%c0, %c0_1, %c0_2] : memref<1x2x16xf32, #tpu.memory_space<vmem>>, vector<1x2x16xf32>
    %4 = vector.shape_cast %3 : vector<1x2x16xf32> to vector<2x16xf32>
    %cst = arith.constant 0.000000e+00 : f32
    %5 = vector.broadcast %cst : f32 to vector<2x1xf32>
    %6 = vector.extract_strided_slice %4 {offsets = [0, 0], sizes = [2, 15], strides = [1, 1]} : vector<2x16xf32> to vector<2x15xf32>
    %7 = tpu.concatenate %5, %6 in 1 : vector<2x1xf32>, vector<2x15xf32> -> vector<2x16xf32>
    %8 = vector.extract_strided_slice %4 {offsets = [0, 1], sizes = [2, 15], strides = [1, 1]} : vector<2x16xf32> to vector<2x15xf32>
    %9 = tpu.concatenate %8, %5 in 1 : vector<2x15xf32>, vector<2x1xf32> -> vector<2x16xf32>
    %10 = vector.shape_cast %7 : vector<2x16xf32> to vector<2x16x1xf32>
    %11 = vector.shape_cast %4 : vector<2x16xf32> to vector<2x16x1xf32>
    %12 = vector.shape_cast %9 : vector<2x16xf32> to vector<2x16x1xf32>
    %cst_3 = arith.constant 0.000000e+00 : f32
    %13 = vector.broadcast %cst_3 : f32 to vector<2x16x5xf32>
    %14 = tpu.concatenate %10, %11, %12, %13 in 2 : vector<2x16x1xf32>, vector<2x16x1xf32>, vector<2x16x1xf32>, vector<2x16x5xf32> -> vector<2x16x8xf32>
    %15 = vector.shape_cast %14 : vector<2x16x8xf32> to vector<32x8xf32>
    %c208 = arith.constant 208 : index
    %c32 = arith.constant 32 : index
    %16 = vector.load %arg2[%c208, %c32] : memref<256x128xbf16, #tpu.memory_space<vmem>>, vector<8x16xbf16>
    %17 = arith.truncf %15 : vector<32x8xf32> to vector<32x8xbf16>
    %cst_4 = arith.constant dense<0.000000e+00> : vector<32x16xf32>
    %18 = tpu.matmul %17, %16, %cst_4 {dimension_numbers = #tpu.dot_dimension_numbers<[1], [0], [0], [1], [0, 0, 1, 1], [], []>} : vector<32x8xbf16>, vector<8x16xbf16>, vector<32x16xf32> -> vector<32x16xf32>
    %c0_5 = arith.constant 0 : index
    %c0_6 = arith.constant 0 : index
    %19 = vector.load %arg3[%c0_5, %c0_6] : memref<8x128xf32, #tpu.memory_space<vmem>>, vector<1x16xf32>
    %20 = vector.broadcast %19 : vector<1x16xf32> to vector<32x16xf32>
    %21 = arith.addf %18, %20 : vector<32x16xf32>
    %cst_7 = arith.constant 0.000000e+00 : f32
    %22 = vector.broadcast %cst_7 : f32 to vector<32x16xf32>
    %23 = arith.maximumf %21, %22 : vector<32x16xf32>
    %24 = tpu.iota {dimensions = array<i32: 0>} : vector<32x1xi32>
    %c16_i32 = arith.constant 16 : i32
    %c0_i32_8 = arith.constant 0 : i32
    %25 = arith.cmpi eq, %c16_i32, %c0_i32_8 : i32
    %c1_i32 = arith.constant 1 : i32
    %26 = arith.select %25, %c1_i32, %c16_i32 : i32
    %27 = vector.broadcast %26 : i32 to vector<32x1xi32>
    %28 = arith.remsi %24, %27 : vector<32x1xi32>
    %c0_i32_9 = arith.constant 0 : i32
    %29 = vector.broadcast %c0_i32_9 : i32 to vector<32x1xi32>
    %30 = arith.cmpi ne, %28, %29 : vector<32x1xi32>
    %c0_i32_10 = arith.constant 0 : i32
    %31 = vector.broadcast %c0_i32_10 : i32 to vector<32x1xi32>
    %32 = arith.cmpi slt, %28, %31 : vector<32x1xi32>
    %c0_i32_11 = arith.constant 0 : i32
    %33 = arith.cmpi slt, %26, %c0_i32_11 : i32
    %34 = vector.broadcast %33 : i1 to vector<32x1xi1>
    %35 = vector.broadcast %34 : vector<32x1xi1> to vector<32x1xi1>
    %36 = arith.xori %32, %35 : vector<32x1xi1>
    %37 = arith.andi %36, %30 : vector<32x1xi1>
    %38 = vector.broadcast %26 : i32 to vector<32x1xi32>
    %39 = arith.addi %28, %38 : vector<32x1xi32>
    %40 = arith.select %37, %39, %28 : vector<32x1xi1>, vector<32x1xi32>
    %cst_12 = arith.constant 0.000000e+00 : f32
    %41 = vector.broadcast %cst_12 : f32 to vector<1x16xf32>
    %c0_i32_13 = arith.constant 0 : i32
    %42 = vector.broadcast %c0_i32_13 : i32 to vector<32x1xi32>
    %43 = arith.cmpi eq, %40, %42 : vector<32x1xi32>
    %44 = vector.extract_strided_slice %23 {offsets = [0, 0], sizes = [31, 16], strides = [1, 1]} : vector<32x16xf32> to vector<31x16xf32>
    %45 = tpu.concatenate %41, %44 in 0 : vector<1x16xf32>, vector<31x16xf32> -> vector<32x16xf32>
    %cst_14 = arith.constant 0.000000e+00 : f32
    %46 = vector.shape_cast %43 : vector<32x1xi1> to vector<32x1xi1>
    %47 = vector.broadcast %46 : vector<32x1xi1> to vector<32x16xi1>
    %48 = vector.broadcast %cst_14 : f32 to vector<32x16xf32>
    %49 = arith.select %47, %48, %45 : vector<32x16xi1>, vector<32x16xf32>
    %c15_i32 = arith.constant 15 : i32
    %50 = vector.broadcast %c15_i32 : i32 to vector<32x1xi32>
    %51 = arith.cmpi eq, %40, %50 : vector<32x1xi32>
    %52 = vector.extract_strided_slice %23 {offsets = [1, 0], sizes = [31, 16], strides = [1, 1]} : vector<32x16xf32> to vector<31x16xf32>
    %53 = tpu.concatenate %52, %41 in 0 : vector<31x16xf32>, vector<1x16xf32> -> vector<32x16xf32>
    %cst_15 = arith.constant 0.000000e+00 : f32
    %54 = vector.shape_cast %51 : vector<32x1xi1> to vector<32x1xi1>
    %55 = vector.broadcast %54 : vector<32x1xi1> to vector<32x16xi1>
    %56 = vector.broadcast %cst_15 : f32 to vector<32x16xf32>
    %57 = arith.select %55, %56, %53 : vector<32x16xi1>, vector<32x16xf32>
    %58 = tpu.concatenate %49, %23, %57 in 1 : vector<32x16xf32>, vector<32x16xf32>, vector<32x16xf32> -> vector<32x48xf32>
    %c128 = arith.constant 128 : index
    %c32_16 = arith.constant 32 : index
    %59 = vector.load %arg2[%c128, %c32_16] : memref<256x128xbf16, #tpu.memory_space<vmem>>, vector<48x32xbf16>
    %60 = arith.truncf %58 : vector<32x48xf32> to vector<32x48xbf16>
    %cst_17 = arith.constant dense<0.000000e+00> : vector<32x32xf32>
    %61 = tpu.matmul %60, %59, %cst_17 {dimension_numbers = #tpu.dot_dimension_numbers<[1], [0], [0], [1], [0, 0, 1, 1], [], []>} : vector<32x48xbf16>, vector<48x32xbf16>, vector<32x32xf32> -> vector<32x32xf32>
    %c1 = arith.constant 1 : index
    %c0_18 = arith.constant 0 : index
    %62 = vector.load %arg3[%c1, %c0_18] : memref<8x128xf32, #tpu.memory_space<vmem>>, vector<1x32xf32>
    %63 = vector.broadcast %62 : vector<1x32xf32> to vector<32x32xf32>
    %64 = arith.addf %61, %63 : vector<32x32xf32>
    %cst_19 = arith.constant 0.000000e+00 : f32
    %65 = vector.broadcast %cst_19 : f32 to vector<32x32xf32>
    %66 = arith.maximumf %64, %65 : vector<32x32xf32>
    %67 = vector.extract_strided_slice %66 {offsets = [1, 0], sizes = [31, 32], strides = [1, 1]} : vector<32x32xf32> to vector<31x32xf32>
    %cst_20 = arith.constant 0.000000e+00 : f32
    %68 = vector.broadcast %cst_20 : f32 to vector<1x32xf32>
    %69 = tpu.concatenate %67, %68 in 0 : vector<31x32xf32>, vector<1x32xf32> -> vector<32x32xf32>
    %70 = arith.maximumf %66, %69 : vector<32x32xf32>
    %71 = vector.shape_cast %70 : vector<32x32xf32> to vector<2x16x32xf32>
    %72 = vector.extract_strided_slice %71 {offsets = [0, 0, 0], sizes = [2, 1, 32], strides = [1, 1, 1]} : vector<2x16x32xf32> to vector<2x1x32xf32>
    %73 = vector.shape_cast %72 : vector<2x1x32xf32> to vector<2x32xf32>
    %74 = vector.extract_strided_slice %71 {offsets = [0, 2, 0], sizes = [2, 1, 32], strides = [1, 1, 1]} : vector<2x16x32xf32> to vector<2x1x32xf32>
    %75 = vector.shape_cast %74 : vector<2x1x32xf32> to vector<2x32xf32>
    %76 = vector.extract_strided_slice %71 {offsets = [0, 4, 0], sizes = [2, 1, 32], strides = [1, 1, 1]} : vector<2x16x32xf32> to vector<2x1x32xf32>
    %77 = vector.shape_cast %76 : vector<2x1x32xf32> to vector<2x32xf32>
    %78 = vector.extract_strided_slice %71 {offsets = [0, 6, 0], sizes = [2, 1, 32], strides = [1, 1, 1]} : vector<2x16x32xf32> to vector<2x1x32xf32>
    %79 = vector.shape_cast %78 : vector<2x1x32xf32> to vector<2x32xf32>
    %80 = vector.extract_strided_slice %71 {offsets = [0, 8, 0], sizes = [2, 1, 32], strides = [1, 1, 1]} : vector<2x16x32xf32> to vector<2x1x32xf32>
    %81 = vector.shape_cast %80 : vector<2x1x32xf32> to vector<2x32xf32>
    %82 = vector.extract_strided_slice %71 {offsets = [0, 10, 0], sizes = [2, 1, 32], strides = [1, 1, 1]} : vector<2x16x32xf32> to vector<2x1x32xf32>
    %83 = vector.shape_cast %82 : vector<2x1x32xf32> to vector<2x32xf32>
    %84 = vector.extract_strided_slice %71 {offsets = [0, 12, 0], sizes = [2, 1, 32], strides = [1, 1, 1]} : vector<2x16x32xf32> to vector<2x1x32xf32>
    %85 = vector.shape_cast %84 : vector<2x1x32xf32> to vector<2x32xf32>
    %86 = vector.extract_strided_slice %71 {offsets = [0, 14, 0], sizes = [2, 1, 32], strides = [1, 1, 1]} : vector<2x16x32xf32> to vector<2x1x32xf32>
    %87 = vector.shape_cast %86 : vector<2x1x32xf32> to vector<2x32xf32>
    %88 = tpu.concatenate %73, %75, %77, %79, %81, %83, %85, %87 in 1 : vector<2x32xf32>, vector<2x32xf32>, vector<2x32xf32>, vector<2x32xf32>, vector<2x32xf32>, vector<2x32xf32>, vector<2x32xf32>, vector<2x32xf32> -> vector<2x256xf32>
    %c0_21 = arith.constant 0 : index
    %c0_22 = arith.constant 0 : index
    %89 = vector.load %arg2[%c0_21, %c0_22] : memref<256x128xbf16, #tpu.memory_space<vmem>>, vector<256x32xbf16>
    %90 = arith.truncf %88 : vector<2x256xf32> to vector<2x256xbf16>
    %cst_23 = arith.constant dense<0.000000e+00> : vector<2x32xf32>
    %91 = tpu.matmul %90, %89, %cst_23 {dimension_numbers = #tpu.dot_dimension_numbers<[1], [0], [0], [1], [0, 0, 1, 1], [], []>} : vector<2x256xbf16>, vector<256x32xbf16>, vector<2x32xf32> -> vector<2x32xf32>
    %c2 = arith.constant 2 : index
    %c0_24 = arith.constant 0 : index
    %92 = vector.load %arg3[%c2, %c0_24] : memref<8x128xf32, #tpu.memory_space<vmem>>, vector<1x32xf32>
    %93 = vector.broadcast %92 : vector<1x32xf32> to vector<2x32xf32>
    %94 = arith.addf %91, %93 : vector<2x32xf32>
    %cst_25 = arith.constant 0.000000e+00 : f32
    %95 = vector.broadcast %cst_25 : f32 to vector<2x32xf32>
    %96 = arith.maximumf %94, %95 : vector<2x32xf32>
    %c0_26 = arith.constant 0 : index
    %c0_27 = arith.constant 0 : index
    %c0_28 = arith.constant 0 : index
    %97 = vector.load %arg6[%c0_26, %c0_27, %c0_28] : memref<2x2x32xf32, #tpu.memory_space<vmem>>, vector<1x2x32xf32>
    %98 = vector.shape_cast %97 : vector<1x2x32xf32> to vector<2x32xf32>
    %cst_29 = arith.constant 0.000000e+00 : f32
    %99 = vector.broadcast %cst_29 : f32 to vector<2x32xf32>
    %100 = tpu.concatenate %96, %99 in 1 : vector<2x32xf32>, vector<2x32xf32> -> vector<2x64xf32>
    %cst_30 = arith.constant 0.000000e+00 : f32
    %101 = vector.broadcast %cst_30 : f32 to vector<2x32xf32>
    %102 = tpu.concatenate %101, %98 in 1 : vector<2x32xf32>, vector<2x32xf32> -> vector<2x64xf32>
    %103 = tpu.concatenate %100, %102 in 0 : vector<2x64xf32>, vector<2x64xf32> -> vector<4x64xf32>
    %c0_31 = arith.constant 0 : index
    %c32_32 = arith.constant 32 : index
    %104 = vector.load %arg2[%c0_31, %c32_32] : memref<256x128xbf16, #tpu.memory_space<vmem>>, vector<64x96xbf16>
    %105 = arith.truncf %103 : vector<4x64xf32> to vector<4x64xbf16>
    %cst_33 = arith.constant dense<0.000000e+00> : vector<4x96xf32>
    %106 = tpu.matmul %105, %104, %cst_33 {dimension_numbers = #tpu.dot_dimension_numbers<[1], [0], [0], [1], [0, 0, 1, 1], [], []>} : vector<4x64xbf16>, vector<64x96xbf16>, vector<4x96xf32> -> vector<4x96xf32>
    %107 = vector.extract_strided_slice %106 {offsets = [0, 0], sizes = [2, 96], strides = [1, 1]} : vector<4x96xf32> to vector<2x96xf32>
    %c3 = arith.constant 3 : index
    %c0_34 = arith.constant 0 : index
    %108 = vector.load %arg3[%c3, %c0_34] : memref<8x128xf32, #tpu.memory_space<vmem>>, vector<1x96xf32>
    %109 = vector.broadcast %108 : vector<1x96xf32> to vector<2x96xf32>
    %110 = arith.addf %107, %109 : vector<2x96xf32>
    %111 = vector.extract_strided_slice %106 {offsets = [2, 0], sizes = [2, 96], strides = [1, 1]} : vector<4x96xf32> to vector<2x96xf32>
    %c4 = arith.constant 4 : index
    %c0_35 = arith.constant 0 : index
    %112 = vector.load %arg3[%c4, %c0_35] : memref<8x128xf32, #tpu.memory_space<vmem>>, vector<1x96xf32>
    %113 = vector.broadcast %112 : vector<1x96xf32> to vector<2x96xf32>
    %114 = arith.addf %111, %113 : vector<2x96xf32>
    %115 = vector.extract_strided_slice %110 {offsets = [0, 0], sizes = [2, 32], strides = [1, 1]} : vector<2x96xf32> to vector<2x32xf32>
    %116 = vector.extract_strided_slice %114 {offsets = [0, 0], sizes = [2, 32], strides = [1, 1]} : vector<2x96xf32> to vector<2x32xf32>
    %117 = arith.addf %115, %116 : vector<2x32xf32>
    %118 = arith.negf %117 : vector<2x32xf32>
    %119 = math.exp %118 : vector<2x32xf32>
    %cst_36 = arith.constant 1.000000e+00 : f32
    %120 = vector.broadcast %cst_36 : f32 to vector<2x32xf32>
    %121 = arith.addf %120, %119 : vector<2x32xf32>
    %122 = arith.divf %120, %121 : vector<2x32xf32>
    %123 = vector.extract_strided_slice %110 {offsets = [0, 32], sizes = [2, 32], strides = [1, 1]} : vector<2x96xf32> to vector<2x32xf32>
    %124 = vector.extract_strided_slice %114 {offsets = [0, 32], sizes = [2, 32], strides = [1, 1]} : vector<2x96xf32> to vector<2x32xf32>
    %125 = arith.addf %123, %124 : vector<2x32xf32>
    %126 = arith.negf %125 : vector<2x32xf32>
    %127 = math.exp %126 : vector<2x32xf32>
    %cst_37 = arith.constant 1.000000e+00 : f32
    %128 = vector.broadcast %cst_37 : f32 to vector<2x32xf32>
    %129 = arith.addf %128, %127 : vector<2x32xf32>
    %130 = arith.divf %128, %129 : vector<2x32xf32>
    %131 = vector.extract_strided_slice %110 {offsets = [0, 64], sizes = [2, 32], strides = [1, 1]} : vector<2x96xf32> to vector<2x32xf32>
    %132 = vector.extract_strided_slice %114 {offsets = [0, 64], sizes = [2, 32], strides = [1, 1]} : vector<2x96xf32> to vector<2x32xf32>
    %133 = arith.mulf %122, %132 : vector<2x32xf32>
    %134 = arith.addf %131, %133 : vector<2x32xf32>
    %135 = math.tanh %134 : vector<2x32xf32>
    %cst_38 = arith.constant 1.000000e+00 : f32
    %136 = vector.broadcast %cst_38 : f32 to vector<2x32xf32>
    %137 = arith.subf %136, %130 : vector<2x32xf32>
    %138 = arith.mulf %137, %135 : vector<2x32xf32>
    %139 = arith.mulf %130, %98 : vector<2x32xf32>
    %140 = arith.addf %138, %139 : vector<2x32xf32>
    %c0_39 = arith.constant 0 : index
    %c0_40 = arith.constant 0 : index
    %c0_41 = arith.constant 0 : index
    %141 = vector.load %arg6[%c0_39, %c0_40, %c0_41] : memref<2x2x32xf32, #tpu.memory_space<vmem>>, vector<1x2x32xf32>
    %142 = vector.shape_cast %141 : vector<1x2x32xf32> to vector<2x32xf32>
    %143 = vector.shape_cast %140 : vector<2x32xf32> to vector<1x2x32xf32>
    tpu.vector_store %arg6[%c0_39, %c0_40, %c0_41], %143 {strides = array<i32>} : memref<2x2x32xf32, #tpu.memory_space<vmem>>, vector<1x2x32xf32>,
    %c1_42 = arith.constant 1 : index
    %c0_43 = arith.constant 0 : index
    %c0_44 = arith.constant 0 : index
    %144 = vector.load %arg6[%c1_42, %c0_43, %c0_44] : memref<2x2x32xf32, #tpu.memory_space<vmem>>, vector<1x2x32xf32>
    %145 = vector.shape_cast %144 : vector<1x2x32xf32> to vector<2x32xf32>
    %cst_45 = arith.constant 0.000000e+00 : f32
    %146 = vector.broadcast %cst_45 : f32 to vector<2x32xf32>
    %147 = tpu.concatenate %140, %146 in 1 : vector<2x32xf32>, vector<2x32xf32> -> vector<2x64xf32>
    %cst_46 = arith.constant 0.000000e+00 : f32
    %148 = vector.broadcast %cst_46 : f32 to vector<2x32xf32>
    %149 = tpu.concatenate %148, %145 in 1 : vector<2x32xf32>, vector<2x32xf32> -> vector<2x64xf32>
    %150 = tpu.concatenate %147, %149 in 0 : vector<2x64xf32>, vector<2x64xf32> -> vector<4x64xf32>
    %c64 = arith.constant 64 : index
    %c32_47 = arith.constant 32 : index
    %151 = vector.load %arg2[%c64, %c32_47] : memref<256x128xbf16, #tpu.memory_space<vmem>>, vector<64x96xbf16>
    %152 = arith.truncf %150 : vector<4x64xf32> to vector<4x64xbf16>
    %cst_48 = arith.constant dense<0.000000e+00> : vector<4x96xf32>
    %153 = tpu.matmul %152, %151, %cst_48 {dimension_numbers = #tpu.dot_dimension_numbers<[1], [0], [0], [1], [0, 0, 1, 1], [], []>} : vector<4x64xbf16>, vector<64x96xbf16>, vector<4x96xf32> -> vector<4x96xf32>
    %154 = vector.extract_strided_slice %153 {offsets = [0, 0], sizes = [2, 96], strides = [1, 1]} : vector<4x96xf32> to vector<2x96xf32>
    %c5 = arith.constant 5 : index
    %c0_49 = arith.constant 0 : index
    %155 = vector.load %arg3[%c5, %c0_49] : memref<8x128xf32, #tpu.memory_space<vmem>>, vector<1x96xf32>
    %156 = vector.broadcast %155 : vector<1x96xf32> to vector<2x96xf32>
    %157 = arith.addf %154, %156 : vector<2x96xf32>
    %158 = vector.extract_strided_slice %153 {offsets = [2, 0], sizes = [2, 96], strides = [1, 1]} : vector<4x96xf32> to vector<2x96xf32>
    %c6 = arith.constant 6 : index
    %c0_50 = arith.constant 0 : index
    %159 = vector.load %arg3[%c6, %c0_50] : memref<8x128xf32, #tpu.memory_space<vmem>>, vector<1x96xf32>
    %160 = vector.broadcast %159 : vector<1x96xf32> to vector<2x96xf32>
    %161 = arith.addf %158, %160 : vector<2x96xf32>
    %162 = vector.extract_strided_slice %157 {offsets = [0, 0], sizes = [2, 32], strides = [1, 1]} : vector<2x96xf32> to vector<2x32xf32>
    %163 = vector.extract_strided_slice %161 {offsets = [0, 0], sizes = [2, 32], strides = [1, 1]} : vector<2x96xf32> to vector<2x32xf32>
    %164 = arith.addf %162, %163 : vector<2x32xf32>
    %165 = arith.negf %164 : vector<2x32xf32>
    %166 = math.exp %165 : vector<2x32xf32>
    %cst_51 = arith.constant 1.000000e+00 : f32
    %167 = vector.broadcast %cst_51 : f32 to vector<2x32xf32>
    %168 = arith.addf %167, %166 : vector<2x32xf32>
    %169 = arith.divf %167, %168 : vector<2x32xf32>
    %170 = vector.extract_strided_slice %157 {offsets = [0, 32], sizes = [2, 32], strides = [1, 1]} : vector<2x96xf32> to vector<2x32xf32>
    %171 = vector.extract_strided_slice %161 {offsets = [0, 32], sizes = [2, 32], strides = [1, 1]} : vector<2x96xf32> to vector<2x32xf32>
    %172 = arith.addf %170, %171 : vector<2x32xf32>
    %173 = arith.negf %172 : vector<2x32xf32>
    %174 = math.exp %173 : vector<2x32xf32>
    %cst_52 = arith.constant 1.000000e+00 : f32
    %175 = vector.broadcast %cst_52 : f32 to vector<2x32xf32>
    %176 = arith.addf %175, %174 : vector<2x32xf32>
    %177 = arith.divf %175, %176 : vector<2x32xf32>
    %178 = vector.extract_strided_slice %157 {offsets = [0, 64], sizes = [2, 32], strides = [1, 1]} : vector<2x96xf32> to vector<2x32xf32>
    %179 = vector.extract_strided_slice %161 {offsets = [0, 64], sizes = [2, 32], strides = [1, 1]} : vector<2x96xf32> to vector<2x32xf32>
    %180 = arith.mulf %169, %179 : vector<2x32xf32>
    %181 = arith.addf %178, %180 : vector<2x32xf32>
    %182 = math.tanh %181 : vector<2x32xf32>
    %cst_53 = arith.constant 1.000000e+00 : f32
    %183 = vector.broadcast %cst_53 : f32 to vector<2x32xf32>
    %184 = arith.subf %183, %177 : vector<2x32xf32>
    %185 = arith.mulf %184, %182 : vector<2x32xf32>
    %186 = arith.mulf %177, %145 : vector<2x32xf32>
    %187 = arith.addf %185, %186 : vector<2x32xf32>
    %c1_54 = arith.constant 1 : index
    %c0_55 = arith.constant 0 : index
    %c0_56 = arith.constant 0 : index
    %188 = vector.load %arg6[%c1_54, %c0_55, %c0_56] : memref<2x2x32xf32, #tpu.memory_space<vmem>>, vector<1x2x32xf32>
    %189 = vector.shape_cast %188 : vector<1x2x32xf32> to vector<2x32xf32>
    %190 = vector.shape_cast %187 : vector<2x32xf32> to vector<1x2x32xf32>
    tpu.vector_store %arg6[%c1_54, %c0_55, %c0_56], %190 {strides = array<i32>} : memref<2x2x32xf32, #tpu.memory_space<vmem>>, vector<1x2x32xf32>,
    %c176 = arith.constant 176 : index
    %c32_57 = arith.constant 32 : index
    %191 = vector.load %arg2[%c176, %c32_57] : memref<256x128xbf16, #tpu.memory_space<vmem>>, vector<32x4xbf16>
    %192 = arith.truncf %187 : vector<2x32xf32> to vector<2x32xbf16>
    %cst_58 = arith.constant dense<0.000000e+00> : vector<2x4xf32>
    %193 = tpu.matmul %192, %191, %cst_58 {dimension_numbers = #tpu.dot_dimension_numbers<[1], [0], [0], [1], [0, 0, 1, 1], [], []>} : vector<2x32xbf16>, vector<32x4xbf16>, vector<2x4xf32> -> vector<2x4xf32>
    %c7 = arith.constant 7 : index
    %c0_59 = arith.constant 0 : index
    %194 = vector.load %arg3[%c7, %c0_59] : memref<8x128xf32, #tpu.memory_space<vmem>>, vector<1x4xf32>
    %195 = vector.broadcast %194 : vector<1x4xf32> to vector<2x4xf32>
    %196 = arith.addf %193, %195 : vector<2x4xf32>
    %cst_60 = arith.constant dense<0xFF800000> : vector<2xf32>
    %197 = vector.multi_reduction <maximumf>, %196, %cst_60 [1] : vector<2x4xf32> to vector<2xf32>
    %198 = vector.shape_cast %197 : vector<2xf32> to vector<2x1xf32>
    %199 = vector.broadcast %198 : vector<2x1xf32> to vector<2x4xf32>
    %200 = arith.subf %196, %199 : vector<2x4xf32>
    %201 = math.exp %200 : vector<2x4xf32>
    %cst_61 = arith.constant dense<0.000000e+00> : vector<2xf32>
    %202 = vector.multi_reduction <add>, %201, %cst_61 [1] : vector<2x4xf32> to vector<2xf32>
    %203 = vector.shape_cast %202 : vector<2xf32> to vector<2x1xf32>
    %204 = vector.broadcast %203 : vector<2x1xf32> to vector<2x4xf32>
    %205 = arith.divf %201, %204 : vector<2x4xf32>
    %c0_62 = arith.constant 0 : index
    %c0_63 = arith.constant 0 : index
    %c0_64 = arith.constant 0 : index
    %206 = vector.load %arg5[%c0_62, %c0_63, %c0_64] : memref<1x2x4xf32, #tpu.memory_space<vmem>>, vector<1x2x4xf32>
    %207 = vector.shape_cast %206 : vector<1x2x4xf32> to vector<2x4xf32>
    %208 = vector.shape_cast %205 : vector<2x4xf32> to vector<1x2x4xf32>
    tpu.vector_store %arg5[%c0_62, %c0_63, %c0_64], %208 {strides = array<i32>} : memref<1x2x4xf32, #tpu.memory_space<vmem>>, vector<1x2x4xf32>,
    return
  }
  func.func @transform_0(%arg0: i32) -> (i32, i32, i32) {
    %c0_i32 = arith.constant 0 : i32
    %c0_i32_0 = arith.constant 0 : i32
    %c0_i32_1 = arith.constant 0 : i32
    return %arg0, %c0_i32, %c0_i32_0 : i32, i32, i32
  }
  func.func @transform_1(%arg0: i32) -> (i32, i32) {
    %c0_i32 = arith.constant 0 : i32
    %c0_i32_0 = arith.constant 0 : i32
    %c0_i32_1 = arith.constant 0 : i32
    return %c0_i32, %c0_i32_0 : i32, i32
  }
  func.func @transform_2(%arg0: i32) -> (i32, i32) {
    %c0_i32 = arith.constant 0 : i32
    %c0_i32_0 = arith.constant 0 : i32
    %c0_i32_1 = arith.constant 0 : i32
    return %c0_i32, %c0_i32_0 : i32, i32
  }
  func.func @transform_3(%arg0: i32) -> (i32, i32, i32) {
    %c0_i32 = arith.constant 0 : i32
    %c0_i32_0 = arith.constant 0 : i32
    %c0_i32_1 = arith.constant 0 : i32
    %c0_i32_2 = arith.constant 0 : i32
    return %c0_i32, %c0_i32_0, %c0_i32_1 : i32, i32, i32
  }
  func.func @transform_4(%arg0: i32) -> (i32, i32, i32) {
    %c0_i32 = arith.constant 0 : i32
    %c0_i32_0 = arith.constant 0 : i32
    %c0_i32_1 = arith.constant 0 : i32
    return %arg0, %c0_i32, %c0_i32_0 : i32, i32, i32
  }
  func.func @transform_5(%arg0: i32) -> (i32, i32, i32) {
    %c0_i32 = arith.constant 0 : i32
    %c0_i32_0 = arith.constant 0 : i32
    %c0_i32_1 = arith.constant 0 : i32
    %c0_i32_2 = arith.constant 0 : i32
    return %c0_i32, %c0_i32_0, %c0_i32_1 : i32, i32, i32
  }
}

</mosaic_0001>

<llo_original>
// kernel: _policy_steps.1
$region0: #{_policy_steps.1}
  #allocation0 [shape = 'u32[]', space=smem, size = 0x4, offset = 0x4, fixed_abs, tag = 'smem constant byte address 0x4 - core index']
  #allocation1 [shape = 'u32[144,128]{1,0:T(1,128)}', space=vmem, size = 0x12000, scoped, tag = 'internal scratch']
  %s0 = inlined_call_operand.hbm [shape: f32[1,2,16], index: 0, kind: input, shape index: {}]
  %s1 = inlined_call_operand.hbm [shape: bf16[256,128], index: 1, kind: input, shape index: {}]
  %s2 = inlined_call_operand.hbm [shape: f32[8,128], index: 2, kind: input, shape index: {}]
  %s3 = inlined_call_operand.hbm [shape: f32[2,2,32], index: 3, kind: input, shape index: {}, may-alias: {3,5}]
  %s4 = inlined_call_operand.hbm [shape: f32[1,2,4], index: 4, kind: output, shape index: {0}]
  %s5 = inlined_call_operand.hbm [shape: f32[2,2,32], index: 5, kind: output, shape index: {1}, may-alias: {3,5}]
  %6 = xla_tuple %s4, %s5
  %s7 = sld [smem:[#allocation0]]
  $region54: #{_policy_steps.1} parent=0
    _
  %s9 = ssub.s32 1, %s7
  %s10 = scalar_select 0, %s9, %s7
  $region1: #{_policy_steps.1} parent=0
    #allocation2 [shape = 'u8[1024]{0}', space=vmem, size = 0x400, scoped, tag = 'input window, operand 0, single buffered']
    #allocation3 [shape = 's32[1]{0}', space=sflag, size = 0x4, scoped, tag = 'scoped memory for _policy_steps.1']
    #allocation4 [shape = 's32[1]{0}', space=sflag, size = 0x4, scoped, tag = 'scoped memory for _policy_steps.1']
    #allocation5 [shape = 'u8[65536]{0}', space=vmem, size = 0x10000, scoped, tag = 'input window, operand 1, single buffered']
    #allocation6 [shape = 's32[1]{0}', space=sflag, size = 0x4, scoped, tag = 'scoped memory for _policy_steps.1']
    #allocation7 [shape = 'u8[4096]{0}', space=vmem, size = 0x1000, scoped, tag = 'input window, operand 2, single buffered']
    #allocation8 [shape = 'u8[2048]{0}', space=vmem, size = 0x800, scoped, tag = 'input window, operand 3, single buffered']
    #allocation9 [shape = 's32[1]{0}', space=sflag, size = 0x4, scoped, tag = 'scoped memory for _policy_steps.1']
    #allocation10 [shape = 'u8[1024]{0}', space=vmem, size = 0x400, scoped, tag = 'output window, operand 0, single buffered']
    #allocation11 [shape = 'u8[2048]{0}', space=vmem, size = 0x800, scoped, tag = 'output window, operand 1, single buffered']
    #allocation12 [shape = 's32[1]{0}', space=sflag, size = 0x4, scoped, tag = 'scoped memory for _policy_steps.1']
    %11 = vsyncpa [#allocation3], 0
    %12 = vsyncpa [#allocation6], 0
    %13 = vsyncpa [#allocation9], 0
    %14 = vsyncpa [#allocation4], 0
    %15 = vsyncpa [#allocation12], 0
    // Predicated region
    $region2: #{_policy_steps.1} parent=1 // pred_check
      _
    $region3: #{_policy_steps.1} parent=1 // pred_check_branch
      %17 = sbr.rel (0) target = $region5
    $region4: #{_policy_steps.1} parent=1 // pred_region
      %s19 = ssub.s32 32, 32
      %20 = vsyncadd [#allocation3], %s19
      %s22 = sshll.u32 [#allocation2], 4
      %s23 = int_to_ptr.vmem [resolvable:$true] %s22
      %25 = dma.hbm_to_vmem [thread:$0]  %s0, 32, %s23, [#allocation3]
    $region5: #{_policy_steps.1} parent=1 // pred_fallthru
      _
    // Predicated region
    $region6: #{_policy_steps.1} parent=1 // pred_check
      _
    $region7: #{_policy_steps.1} parent=1 // pred_check_branch
      %27 = sbr.rel (0) target = $region9
    $region8: #{_policy_steps.1} parent=1 // pred_region
      %s29 = ssub.s32 2048, 2048
      %30 = vsyncadd [#allocation6], %s29
      %s31 = sshll.u32 [#allocation5], 4
      %s32 = int_to_ptr.vmem [resolvable:$true] %s31
      %37 = dma.hbm_to_vmem [thread:$0]  %s1, 2048, %s32, [#allocation6], 64, 64, 4
    $region9: #{_policy_steps.1} parent=1 // pred_fallthru
      _
    // Predicated region
    $region10: #{_policy_steps.1} parent=1 // pred_check
      _
    $region11: #{_policy_steps.1} parent=1 // pred_check_branch
      %39 = sbr.rel (0) target = $region13
    $region12: #{_policy_steps.1} parent=1 // pred_region
      %s41 = ssub.s32 128, 128
      %42 = vsyncadd [#allocation6], %s41
      %s44 = sshll.u32 [#allocation7], 4
      %s45 = int_to_ptr.vmem [resolvable:$true] %s44
      %47 = dma.hbm_to_vmem [thread:$0]  %s2, 128, %s45, [#allocation6]
    $region13: #{_policy_steps.1} parent=1 // pred_fallthru
      _
    // Predicated region
    $region14: #{_policy_steps.1} parent=1 // pred_check
      _
    $region15: #{_policy_steps.1} parent=1 // pred_check_branch
      %49 = sbr.rel (0) target = $region17
    $region16: #{_policy_steps.1} parent=1 // pred_region
      %s51 = ssub.s32 64, 64
      %52 = vsyncadd [#allocation9], %s51
      %s53 = sshll.u32 [#allocation8], 4
      %s54 = int_to_ptr.vmem [resolvable:$true] %s53
      %59 = dma.hbm_to_vmem [thread:$0]  %s3, 64, %s54, [#allocation9], 32, 32, 2
    $region17: #{_policy_steps.1} parent=1 // pred_fallthru
      _
    // Predicated region
    $region18: #{_policy_steps.1} parent=1 // pred_check
      _
    $region19: #{_policy_steps.1} parent=1 // pred_check_branch
      %61 = sbr.rel (0) target = $region21
    $region20: #{_policy_steps.1} parent=1 // pred_region
      %62 = dma.done [#allocation3], 32
    $region21: #{_policy_steps.1} parent=1 // pred_fallthru
      _
    // Predicated region
    $region22: #{_policy_steps.1} parent=1 // pred_check
      _
    $region23: #{_policy_steps.1} parent=1 // pred_check_branch
      %64 = sbr.rel (0) target = $region25
    $region24: #{_policy_steps.1} parent=1 // pred_region
      %65 = dma.done [#allocation6], 2048
    $region25: #{_policy_steps.1} parent=1 // pred_fallthru
      _
    // Predicated region
    $region26: #{_policy_steps.1} parent=1 // pred_check
      _
    $region27: #{_policy_steps.1} parent=1 // pred_check_branch
      %67 = sbr.rel (0) target = $region29
    $region28: #{_policy_steps.1} parent=1 // pred_region
      %68 = dma.done [#allocation6], 128
    $region29: #{_policy_steps.1} parent=1 // pred_fallthru
      _
    // Predicated region
    $region30: #{_policy_steps.1} parent=1 // pred_check
      _
    $region31: #{_policy_steps.1} parent=1 // pred_check_branch
      %70 = sbr.rel (0) target = $region33
    $region32: #{_policy_steps.1} parent=1 // pred_region
      %71 = dma.done [#allocation9], 64
    $region33: #{_policy_steps.1} parent=1 // pred_fallthru
      _
    %p73 = scmp.eq.s32.totalorder 0, 0
    // Predicated region
    $region34: #{_policy_steps.1} parent=1 // pred_check
      %p74 = pneg %p73
    $region35: #{_policy_steps.1} parent=1 // pred_check_branch
      %76 = sbr.rel (%p74) target = $region37
    $region36: #{_policy_steps.1} parent=1 // pred_region
      %v77 = vld [vmem:[#allocation8] sm:$0x3]
      %v78 = vld [vmem:[#allocation8 + $0x2] sm:$0x3]
      %vm79 = vcmask 254976
      %80 = vst.msk [vmem:[#allocation11] sm:$0x3] %vm79, %v77
      %81 = vst.msk [vmem:[#allocation11 + $0x2] sm:$0x3] %vm79, %v78
    $region37: #{_policy_steps.1} parent=1 // pred_fallthru
      _
    %v82 = vld [vmem:[#allocation2] sm:$0x3]
    %84 = vrot.lane.b32.xlu0 %v82, 1
    %v85 = vpop.permute.xlu0 %84
    %vm87 = vcmask 7168
    %v88 = vsel %vm87, 0.0, %v85
    %89 = vrot.lane.b32.xlu0 %v82, 127
    %v90 = vpop.permute.xlu0 %89
    %vm92 = vcmask 121856
    %v93 = vsel %vm92, %v90, 0.0
    %v94 = vlaneseq
    %v95 = vshrl.u32 %v94, 7
    %v96 = vsub.s32 0, %v95
    %v97 = vrot.slane %v88, %v96
    %99 = vbcast.lane.b32.xlu0 %v97, 256
    %v100 = vpop.permute.xlu0 %99
    %s102 = sor.u32 256, 8
    %103 = vbcast.lane.b32.xlu0 %v97, %s102
    %v104 = vpop.permute.xlu0 %103
    %v105 = vlaneseq
    %v106 = vshrl.u32 %v105, 7
    %v107 = vsub.s32 1, %v106
    %v108 = vrot.slane %v88, %v107
    %110 = vbcast.lane.b32.xlu0 %v108, 256
    %v111 = vpop.permute.xlu0 %110
    %s113 = sor.u32 256, 8
    %114 = vbcast.lane.b32.xlu0 %v108, %s113
    %v115 = vpop.permute.xlu0 %114
    %v116 = vlaneseq
    %v117 = vshrl.u32 %v116, 7
    %v118 = vsub.s32 0, %v117
    %v119 = vrot.slane %v82, %v118
    %121 = vbcast.lane.b32.xlu0 %v119, 256
    %v122 = vpop.permute.xlu0 %121
    %s124 = sor.u32 256, 8
    %125 = vbcast.lane.b32.xlu0 %v119, %s124
    %v126 = vpop.permute.xlu0 %125
    %v127 = vlaneseq
    %v128 = vshrl.u32 %v127, 7
    %v129 = vsub.s32 1, %v128
    %v130 = vrot.slane %v82, %v129
    %132 = vbcast.lane.b32.xlu0 %v130, 256
    %v133 = vpop.permute.xlu0 %132
    %s135 = sor.u32 256, 8
    %136 = vbcast.lane.b32.xlu0 %v130, %s135
    %v137 = vpop.permute.xlu0 %136
    %v138 = vlaneseq
    %v139 = vshrl.u32 %v138, 7
    %v140 = vsub.s32 0, %v139
    %v141 = vrot.slane %v93, %v140
    %143 = vbcast.lane.b32.xlu0 %v141, 256
    %v144 = vpop.permute.xlu0 %143
    %s146 = sor.u32 256, 8
    %147 = vbcast.lane.b32.xlu0 %v141, %s146
    %v148 = vpop.permute.xlu0 %147
    %v149 = vlaneseq
    %v150 = vshrl.u32 %v149, 7
    %v151 = vsub.s32 1, %v150
    %v152 = vrot.slane %v93, %v151
    %154 = vbcast.lane.b32.xlu0 %v152, 256
    %v155 = vpop.permute.xlu0 %154
    %s157 = sor.u32 256, 8
    %158 = vbcast.lane.b32.xlu0 %v152, %s157
    %v159 = vpop.permute.xlu0 %158
    %v160 = vsel %vm87, %v100, %v122
    %v161 = vsel %vm87, %v104, %v126
    %v162 = vsel %vm87, %v111, %v133
    %v163 = vsel %vm87, %v115, %v137
    %vm164 = vcmask 15360
    %v165 = vsel %vm164, %v160, %v144
    %v166 = vsel %vm164, %v161, %v148
    %v167 = vsel %vm164, %v162, %v155
    %v168 = vsel %vm164, %v163, %v159
    %vm169 = vcmask 23552
    %v170 = vsel %vm169, %v165, 0.0
    %v171 = vsel %vm169, %v166, 0.0
    %v172 = vsel %vm169, %v167, 0.0
    %v173 = vsel %vm169, %v168, 0.0
    %v174 = vld [vmem:[#allocation5 + $0x68] sm:$0xf]
    %v175 = vpack.c.bf16 %v171, %v170
    %v176 = vpack.c.bf16 %v173, %v172
    %v177 = vld [vmem:[#allocation7] sm:$0x1]
    %v178 = vlaneseq
    %v179 = vshrl.u32 %v178, 7
    %v180 = vsub.s32 0, %v179
    %v181 = vrot.slane %v177, %v180
    %v183 = vunpack.c.l.b16 %v174
    %v184 = vpack.c.b16 %v183, %v183
    %185 = vrot.lane.b32.xlu0 %v184, 96
    %v186 = vpop.permute.xlu0 %185
    %vm187 = vcmask 64512
    %v189 = vsel %vm187, %v175, 0
    %v192 = vsel %vm187, %v176, 0
    %vm194 = vcmask 1043456
    %v196 = vsel %vm194, %v186, 0
    %198 = vmatprep.subr.bf16.mxu0 0
    %199 = vmatpush1.bf16.msra.mxu0 0
    %200 = vmatprep.subr.bf16.mxu0 0
    %201 = vmatpush1.bf16.msra.mxu0 0
    %202 = vmatprep.subr.bf16.mxu0 0
    %203 = vmatpush1.bf16.msra.mxu0 0
    %204 = vmatprep.subr.bf16.mxu0 0
    %205 = vmatpush1.bf16.msra.mxu0 0
    %206 = vmatprep.subr.bf16.mxu0 0
    %207 = vmatpush1.bf16.msra.mxu0 0
    %208 = vmatprep.subr.bf16.mxu0 0
    %209 = vmatpush1.bf16.msra.mxu0 0
    %210 = vmatprep.subr.bf16.mxu0 0
    %211 = vmatpush1.bf16.msra.mxu0 0
    %212 = vmatprep.subr.bf16.mxu0 0
    %213 = vmatpush1.bf16.msra.mxu0 %v196
    %214 = vmatprep.subr.bf16.mxu0 0
    %215 = vmatpush2.bf16.msra.mxu0 0
    %216 = vmatprep.subr.bf16.mxu0 0
    %217 = vmatpush2.bf16.msra.mxu0 0
    %218 = vmatprep.subr.bf16.mxu0 0
    %219 = vmatpush2.bf16.msra.mxu0 0
    %220 = vmatprep.subr.bf16.mxu0 0
    %221 = vmatpush2.bf16.msra.mxu0 0
    %222 = vmatprep.subr.bf16.mxu0 0
    %223 = vmatpush2.bf16.msra.mxu0 0
    %224 = vmatprep.subr.bf16.mxu0 0
    %225 = vmatpush2.bf16.msra.mxu0 0
    %226 = vmatprep.subr.bf16.mxu0 0
    %227 = vmatpush2.bf16.msra.mxu0 0
    %228 = vmatprep.subr.bf16.mxu0 0
    %229 = vmatpush2.bf16.msra.mxu0 0
    %230 = vmatprep.mubr.bf16.mxu0 0
    %231 = vmatmul.mubr.bf16.gmra.mxu0 %v189
    %v232 = vpop.f32.mrf.mxu0
    %v233 = vadd.f32 %v181, %v232
    %v234 = vpop.f32.mrf.mxu0
    %v235 = vpop.f32.mrf.mxu0
    %v236 = vadd.f32 %v181, %v235
    %v237 = vpop.f32.mrf.mxu0
    %238 = vmatprep.mubr.bf16.mxu0 0
    %239 = vmatmul.mubr.bf16.gmra.mxu0 %v192
    %v240 = vpop.f32.mrf.mxu0
    %v241 = vadd.f32 %v181, %v240
    %v242 = vpop.f32.mrf.mxu0
    %v243 = vpop.f32.mrf.mxu0
    %v244 = vadd.f32 %v181, %v243
    %v245 = vpop.f32.mrf.mxu0
    %246 = vdwg.mxu0
    %v247 = vmax.f32 %v233, 0.0
    %v248 = vmax.f32 %v236, 0.0
    %v249 = vmax.f32 %v241, 0.0
    %v250 = vmax.f32 %v244, 0.0
    %v251 = vlaneseq
    %v252 = vshrl.u32 %v251, 7
    %v253 = vadd.s32 %v252, 8
    %v254 = vadd.s32 %v252, 16
    %v255 = vadd.s32 %v252, 24
    %vm256 = vcmp.lt.s32.totalorder %v252, 0
    %v257 = vsub.s32 0, %v252
    %v258 = vsel %vm256, %v257, %v252
    %v259 = vshrl.u32 %v258, 4
    %v260 = vand.u32 %v258, 15
    %v261 = vsub.s32 0, %v260
    %v262 = vsel %vm256, %v261, %v260
    %vm263 = vcmp.lt.s32.totalorder %v253, 0
    %v264 = vsub.s32 0, %v253
    %v265 = vsel %vm263, %v264, %v253
    %v266 = vshrl.u32 %v265, 4
    %v267 = vand.u32 %v265, 15
    %v268 = vsub.s32 0, %v267
    %v269 = vsel %vm263, %v268, %v267
    %vm270 = vcmp.lt.s32.totalorder %v254, 0
    %v271 = vsub.s32 0, %v254
    %v272 = vsel %vm270, %v271, %v254
    %v273 = vshrl.u32 %v272, 4
    %v274 = vand.u32 %v272, 15
    %v275 = vsub.s32 0, %v274
    %v276 = vsel %vm270, %v275, %v274
    %vm277 = vcmp.lt.s32.totalorder %v255, 0
    %v278 = vsub.s32 0, %v255
    %v279 = vsel %vm277, %v278, %v255
    %v280 = vshrl.u32 %v279, 4
    %v281 = vand.u32 %v279, 15
    %v282 = vsub.s32 0, %v281
    %v283 = vsel %vm277, %v282, %v281
    %vm284 = vcmp.ne.s32.totalorder %v262, 0
    %vm285 = vcmp.ne.s32.totalorder %v269, 0
    %vm286 = vcmp.ne.s32.totalorder %v276, 0
    %vm287 = vcmp.ne.s32.totalorder %v283, 0
    %vm288 = vcmp.lt.s32.totalorder %v262, 0
    %vm289 = vcmp.lt.s32.totalorder %v269, 0
    %vm290 = vcmp.lt.s32.totalorder %v276, 0
    %vm291 = vcmp.lt.s32.totalorder %v283, 0
    %vm292 = vmand %vm288, %vm284
    %vm293 = vmand %vm289, %vm285
    %vm294 = vmand %vm290, %vm286
    %vm295 = vmand %vm291, %vm287
    %v296 = vadd.s32 %v262, 16
    %v297 = vadd.s32 %v269, 16
    %v298 = vadd.s32 %v276, 16
    %v299 = vadd.s32 %v283, 16
    %v300 = vsel %vm292, %v296, %v262
    %v301 = vsel %vm293, %v297, %v269
    %v302 = vsel %vm294, %v298, %v276
    %v303 = vsel %vm295, %v299, %v283
    %vm304 = vcmp.eq.s32.totalorder %v300, 0
    %vm305 = vcmp.eq.s32.totalorder %v301, 0
    %vm306 = vcmp.eq.s32.totalorder %v302, 0
    %vm307 = vcmp.eq.s32.totalorder %v303, 0
    %vm312 = vcmask 1040384
    %v313 = vrot.slane %v247, 7
    %v314 = vrot.slane %v248, 7
    %v315 = vsel %vm312, %v313, %v314
    %v316 = vrot.slane %v249, 7
    %v317 = vsel %vm312, %v314, %v316
    %v318 = vrot.slane %v250, 7
    %v319 = vsel %vm312, %v316, %v318
    %v324 = vsel %vm312, 0.0, %v313
    %v325 = vsel %vm304, 1, 0
    %v326 = vsel %vm305, 1, 0
    %v327 = vsel %vm306, 1, 0
    %v328 = vsel %vm307, 1, 0
    %vm329 = vcmp.eq.s32.totalorder %v325, 1
    %vm330 = vcmp.eq.s32.totalorder %v326, 1
    %vm331 = vcmp.eq.s32.totalorder %v327, 1
    %vm332 = vcmp.eq.s32.totalorder %v328, 1
    %v333 = vsel %vm329, 0.0, %v324
    %v334 = vsel %vm330, 0.0, %v315
    %v335 = vsel %vm331, 0.0, %v317
    %v336 = vsel %vm332, 0.0, %v319
    %vm337 = vcmp.eq.s32.totalorder %v300, 15
    %vm338 = vcmp.eq.s32.totalorder %v301, 15
    %vm339 = vcmp.eq.s32.totalorder %v302, 15
    %vm340 = vcmp.eq.s32.totalorder %v303, 15
    %vm341 = vcmask 1046528
    %v342 = vrot.slane %v247, 1
    %v343 = vrot.slane %v248, 1
    %v344 = vsel %vm341, %v342, %v343
    %v345 = vrot.slane %v249, 1
    %v346 = vsel %vm341, %v343, %v345
    %v347 = vrot.slane %v250, 1
    %v348 = vsel %vm341, %v345, %v347
    %v353 = vsel %vm341, %v347, 0.0
    %v354 = vsel %vm337, 1, 0
    %v355 = vsel %vm338, 1, 0
    %v356 = vsel %vm339, 1, 0
    %v357 = vsel %vm340, 1, 0
    %vm358 = vcmp.eq.s32.totalorder %v354, 1
    %vm359 = vcmp.eq.s32.totalorder %v355, 1
    %vm360 = vcmp.eq.s32.totalorder %v356, 1
    %vm361 = vcmp.eq.s32.totalorder %v357, 1
    %v362 = vsel %vm358, 0.0, %v344
    %v363 = vsel %vm359, 0.0, %v346
    %v364 = vsel %vm360, 0.0, %v348
    %v365 = vsel %vm361, 0.0, %v353
    %366 = vrot.lane.b32.xlu0 %v247, 16
    %v367 = vpop.permute.xlu0 %366
    %368 = vrot.lane.b32.xlu0 %v248, 16
    %v369 = vpop.permute.xlu0 %368
    %370 = vrot.lane.b32.xlu0 %v249, 16
    %v371 = vpop.permute.xlu0 %370
    %372 = vrot.lane.b32.xlu0 %v250, 16
    %v373 = vpop.permute.xlu0 %372
    %382 = vrot.lane.b32.xlu0 %v362, 32
    %v383 = vpop.permute.xlu0 %382
    %384 = vrot.lane.b32.xlu0 %v363, 32
    %v385 = vpop.permute.xlu0 %384
    %386 = vrot.lane.b32.xlu0 %v364, 32
    %v387 = vpop.permute.xlu0 %386
    %388 = vrot.lane.b32.xlu0 %v365, 32
    %v389 = vpop.permute.xlu0 %388
    %vm394 = vcmask 130048
    %v395 = vsel %vm394, %v333, %v367
    %v396 = vsel %vm394, %v334, %v369
    %v397 = vsel %vm394, %v335, %v371
    %v398 = vsel %vm394, %v336, %v373
    %vm399 = vcmask 261120
    %v400 = vsel %vm399, %v395, %v383
    %v401 = vsel %vm399, %v396, %v385
    %v402 = vsel %vm399, %v397, %v387
    %v403 = vsel %vm399, %v398, %v389
    %v404 = vld [vmem:[#allocation5 + $0x40] sm:$0xf]
    %v405 = vld [vmem:[#allocation5 + $0x44] sm:$0xf]
    %v406 = vld [vmem:[#allocation5 + $0x48] sm:$0xf]
    %v407 = vld [vmem:[#allocation5 + $0x4c] sm:$0xf]
    %v408 = vld [vmem:[#allocation5 + $0x50] sm:$0xf]
    %v409 = vld [vmem:[#allocation5 + $0x54] sm:$0xf]
    %v410 = vpack.c.bf16 %v401, %v400
    %v411 = vpack.c.bf16 %v403, %v402
    %v412 = vld [vmem:[#allocation7 + $0x1] sm:$0x1]
    %v413 = vlaneseq
    %v414 = vshrl.u32 %v413, 7
    %v415 = vsub.s32 0, %v414
    %v416 = vrot.slane %v412, %v415
    %v423 = vunpack.c.l.b16 %v404
    %v424 = vunpack.c.l.b16 %v405
    %v425 = vunpack.c.l.b16 %v406
    %v426 = vunpack.c.l.b16 %v407
    %v427 = vunpack.c.l.b16 %v408
    %v428 = vunpack.c.l.b16 %v409
    %v429 = vpack.c.b16 %v424, %v423
    %v430 = vpack.c.b16 %v426, %v425
    %v431 = vpack.c.b16 %v428, %v427
    %432 = vrot.lane.b32.xlu0 %v429, 96
    %v433 = vpop.permute.xlu0 %432
    %434 = vrot.lane.b32.xlu0 %v430, 96
    %v435 = vpop.permute.xlu0 %434
    %436 = vrot.lane.b32.xlu0 %v431, 96
    %v437 = vpop.permute.xlu0 %436
    %vm441 = vcmask 392192
    %v443 = vsel %vm441, %v410, 0
    %v446 = vsel %vm441, %v411, 0
    %448 = vmatprep.subr.bf16.mxu0 0
    %449 = vmatpush1.bf16.msra.mxu0 0
    %450 = vmatprep.subr.bf16.mxu0 0
    %451 = vmatpush1.bf16.msra.mxu0 0
    %452 = vmatprep.subr.bf16.mxu0 0
    %453 = vmatpush1.bf16.msra.mxu0 0
    %454 = vmatprep.subr.bf16.mxu0 0
    %455 = vmatpush1.bf16.msra.mxu0 0
    %456 = vmatprep.subr.bf16.mxu0 0
    %457 = vmatpush1.bf16.msra.mxu0 0
    %458 = vmatprep.subr.bf16.mxu0 0
    %459 = vmatpush1.bf16.msra.mxu0 %v437
    %460 = vmatprep.subr.bf16.mxu0 0
    %461 = vmatpush1.bf16.msra.mxu0 %v435
    %462 = vmatprep.subr.bf16.mxu0 0
    %463 = vmatpush1.bf16.msra.mxu0 %v433
    %464 = vmatprep.subr.bf16.mxu0 0
    %465 = vmatpush2.bf16.msra.mxu0 0
    %466 = vmatprep.subr.bf16.mxu0 0
    %467 = vmatpush2.bf16.msra.mxu0 0
    %468 = vmatprep.subr.bf16.mxu0 0
    %469 = vmatpush2.bf16.msra.mxu0 0
    %470 = vmatprep.subr.bf16.mxu0 0
    %471 = vmatpush2.bf16.msra.mxu0 0
    %472 = vmatprep.subr.bf16.mxu0 0
    %473 = vmatpush2.bf16.msra.mxu0 0
    %474 = vmatprep.subr.bf16.mxu0 0
    %475 = vmatpush2.bf16.msra.mxu0 0
    %476 = vmatprep.subr.bf16.mxu0 0
    %477 = vmatpush2.bf16.msra.mxu0 0
    %478 = vmatprep.subr.bf16.mxu0 0
    %479 = vmatpush2.bf16.msra.mxu0 0
    %480 = vmatprep.mubr.bf16.mxu0 0
    %481 = vmatmul.mubr.bf16.gmra.mxu0 %v443
    %v482 = vpop.f32.mrf.mxu0
    %v483 = vadd.f32 %v416, %v482
    %v484 = vpop.f32.mrf.mxu0
    %v485 = vpop.f32.mrf.mxu0
    %v486 = vadd.f32 %v416, %v485
    %v487 = vpop.f32.mrf.mxu0
    %488 = vmatprep.mubr.bf16.mxu0 0
    %489 = vmatmul.mubr.bf16.gmra.mxu0 %v446
    %v490 = vpop.f32.mrf.mxu0
    %v491 = vadd.f32 %v416, %v490
    %v492 = vpop.f32.mrf.mxu0
    %v493 = vpop.f32.mrf.mxu0
    %v494 = vadd.f32 %v416, %v493
    %v495 = vpop.f32.mrf.mxu0
    %496 = vdwg.mxu0
    %v497 = vmax.f32 %v483, 0.0
    %v498 = vmax.f32 %v486, 0.0
    %v499 = vmax.f32 %v491, 0.0
    %v500 = vmax.f32 %v494, 0.0
    %v505 = vrot.slane %v497, 1
    %v506 = vrot.slane %v498, 1
    %v507 = vsel %vm341, %v505, %v506
    %v508 = vrot.slane %v499, 1
    %v509 = vsel %vm341, %v506, %v508
    %v510 = vrot.slane %v500, 1
    %v511 = vsel %vm341, %v508, %v510
    %v516 = vsel %vm341, %v510, 0.0
    %v517 = vmax.f32 %v497, %v507
    %v518 = vmax.f32 %v498, %v509
    %v519 = vmax.f32 %v499, %v511
    %v520 = vmax.f32 %v500, %v516
    %v523 = vrot.slane %v519, 7
    %vm524 = vcmask 1041409
    %v525 = vsel %vm524, %v523, %v517
    %v527 = vrot.slane %v517, 2
    %v528 = vrot.slane %v519, 1
    %v529 = vsel %vm524, %v528, %v527
    %530 = vrot.lane.b32.xlu0 %v529, 32
    %v531 = vpop.permute.xlu0 %530
    %v533 = vrot.slane %v517, 4
    %v534 = vrot.slane %v519, 3
    %v535 = vsel %vm524, %v534, %v533
    %536 = vrot.lane.b32.xlu0 %v535, 64
    %v537 = vpop.permute.xlu0 %536
    %v539 = vrot.slane %v517, 6
    %v540 = vrot.slane %v519, 5
    %v541 = vsel %vm524, %v540, %v539
    %542 = vrot.lane.b32.xlu0 %v541, 96
    %v543 = vpop.permute.xlu0 %542
    %v547 = vrot.slane %v520, 7
    %v548 = vsel %vm524, %v547, %v518
    %v550 = vrot.slane %v518, 2
    %v551 = vrot.slane %v520, 1
    %v552 = vsel %vm524, %v551, %v550
    %553 = vrot.lane.b32.xlu0 %v552, 32
    %v554 = vpop.permute.xlu0 %553
    %v556 = vrot.slane %v518, 4
    %v557 = vrot.slane %v520, 3
    %v558 = vsel %vm524, %v557, %v556
    %559 = vrot.lane.b32.xlu0 %v558, 64
    %v560 = vpop.permute.xlu0 %559
    %v562 = vrot.slane %v518, 6
    %v563 = vrot.slane %v520, 5
    %v564 = vsel %vm524, %v563, %v562
    %565 = vrot.lane.b32.xlu0 %v564, 96
    %v566 = vpop.permute.xlu0 %565
    %v568 = vsel %vm399, %v525, %v531
    %vm569 = vcmask 523264
    %v570 = vsel %vm569, %v568, %v537
    %vm571 = vcmask 785408
    %v572 = vsel %vm571, %v570, %v543
    %v573 = vsel %vm399, %v548, %v554
    %v574 = vsel %vm569, %v573, %v560
    %v575 = vsel %vm571, %v574, %v566
    %v576 = vld [vmem:[#allocation5] sm:$0xf]
    %v577 = vld [vmem:[#allocation5 + $0x4] sm:$0xf]
    %v578 = vld [vmem:[#allocation5 + $0x8] sm:$0xf]
    %v579 = vld [vmem:[#allocation5 + $0xc] sm:$0xf]
    %v580 = vld [vmem:[#allocation5 + $0x10] sm:$0xf]
    %v581 = vld [vmem:[#allocation5 + $0x14] sm:$0xf]
    %v582 = vld [vmem:[#allocation5 + $0x18] sm:$0xf]
    %v583 = vld [vmem:[#allocation5 + $0x1c] sm:$0xf]
    %v584 = vld [vmem:[#allocation5 + $0x20] sm:$0xf]
    %v585 = vld [vmem:[#allocation5 + $0x24] sm:$0xf]
    %v586 = vld [vmem:[#allocation5 + $0x28] sm:$0xf]
    %v587 = vld [vmem:[#allocation5 + $0x2c] sm:$0xf]
    %v588 = vld [vmem:[#allocation5 + $0x30] sm:$0xf]
    %v589 = vld [vmem:[#allocation5 + $0x34] sm:$0xf]
    %v590 = vld [vmem:[#allocation5 + $0x38] sm:$0xf]
    %v591 = vld [vmem:[#allocation5 + $0x3c] sm:$0xf]
    %v592 = vld [vmem:[#allocation5 + $0x40] sm:$0xf]
    %v593 = vld [vmem:[#allocation5 + $0x44] sm:$0xf]
    %v594 = vld [vmem:[#allocation5 + $0x48] sm:$0xf]
    %v595 = vld [vmem:[#allocation5 + $0x4c] sm:$0xf]
    %v596 = vld [vmem:[#allocation5 + $0x50] sm:$0xf]
    %v597 = vld [vmem:[#allocation5 + $0x54] sm:$0xf]
    %v598 = vld [vmem:[#allocation5 + $0x58] sm:$0xf]
    %v599 = vld [vmem:[#allocation5 + $0x5c] sm:$0xf]
    %v600 = vld [vmem:[#allocation5 + $0x60] sm:$0xf]
    %v601 = vld [vmem:[#allocation5 + $0x64] sm:$0xf]
    %v602 = vld [vmem:[#allocation5 + $0x68] sm:$0xf]
    %v603 = vld [vmem:[#allocation5 + $0x6c] sm:$0xf]
    %v604 = vld [vmem:[#allocation5 + $0x70] sm:$0xf]
    %v605 = vld [vmem:[#allocation5 + $0x74] sm:$0xf]
    %v606 = vld [vmem:[#allocation5 + $0x78] sm:$0xf]
    %v607 = vld [vmem:[#allocation5 + $0x7c] sm:$0xf]
    %v608 = vpack.c.bf16 %v572, %v572
    %v609 = vpack.c.bf16 %v575, %v575
    %v610 = vld [vmem:[#allocation7 + $0x2] sm:$0x1]
    %v611 = vlaneseq
    %v612 = vshrl.u32 %v611, 7
    %v613 = vsub.s32 0, %v612
    %v614 = vrot.slane %v610, %v613
    %v647 = vunpack.c.l.b16 %v576
    %v648 = vunpack.c.l.b16 %v577
    %v649 = vunpack.c.l.b16 %v578
    %v650 = vunpack.c.l.b16 %v579
    %v651 = vunpack.c.l.b16 %v580
    %v652 = vunpack.c.l.b16 %v581
    %v653 = vunpack.c.l.b16 %v582
    %v654 = vunpack.c.l.b16 %v583
    %v655 = vunpack.c.l.b16 %v584
    %v656 = vunpack.c.l.b16 %v585
    %v657 = vunpack.c.l.b16 %v586
    %v658 = vunpack.c.l.b16 %v587
    %v659 = vunpack.c.l.b16 %v588
    %v660 = vunpack.c.l.b16 %v589
    %v661 = vunpack.c.l.b16 %v590
    %v662 = vunpack.c.l.b16 %v591
    %v663 = vunpack.c.l.b16 %v592
    %v664 = vunpack.c.l.b16 %v593
    %v665 = vunpack.c.l.b16 %v594
    %v666 = vunpack.c.l.b16 %v595
    %v667 = vunpack.c.l.b16 %v596
    %v668 = vunpack.c.l.b16 %v597
    %v669 = vunpack.c.l.b16 %v598
    %v670 = vunpack.c.l.b16 %v599
    %v671 = vunpack.c.l.b16 %v600
    %v672 = vunpack.c.l.b16 %v601
    %v673 = vunpack.c.l.b16 %v602
    %v674 = vunpack.c.l.b16 %v603
    %v675 = vunpack.c.l.b16 %v604
    %v676 = vunpack.c.l.b16 %v605
    %v677 = vunpack.c.l.b16 %v606
    %v678 = vunpack.c.l.b16 %v607
    %v679 = vpack.c.b16 %v648, %v647
    %v680 = vpack.c.b16 %v650, %v649
    %v681 = vpack.c.b16 %v652, %v651
    %v682 = vpack.c.b16 %v654, %v653
    %v683 = vpack.c.b16 %v656, %v655
    %v684 = vpack.c.b16 %v658, %v657
    %v685 = vpack.c.b16 %v660, %v659
    %v686 = vpack.c.b16 %v662, %v661
    %v687 = vpack.c.b16 %v664, %v663
    %v688 = vpack.c.b16 %v666, %v665
    %v689 = vpack.c.b16 %v668, %v667
    %v690 = vpack.c.b16 %v670, %v669
    %v691 = vpack.c.b16 %v672, %v671
    %v692 = vpack.c.b16 %v674, %v673
    %v693 = vpack.c.b16 %v676, %v675
    %v694 = vpack.c.b16 %v678, %v677
    %711 = vmatprep.subr.bf16.mxu0 0
    %712 = vmatpush1.bf16.msra.mxu0 %v686
    %713 = vmatprep.subr.bf16.mxu0 0
    %714 = vmatpush1.bf16.msra.mxu0 %v685
    %715 = vmatprep.subr.bf16.mxu0 0
    %716 = vmatpush1.bf16.msra.mxu0 %v684
    %717 = vmatprep.subr.bf16.mxu0 0
    %718 = vmatpush1.bf16.msra.mxu0 %v683
    %719 = vmatprep.subr.bf16.mxu0 0
    %720 = vmatpush1.bf16.msra.mxu0 %v682
    %721 = vmatprep.subr.bf16.mxu0 0
    %722 = vmatpush1.bf16.msra.mxu0 %v681
    %723 = vmatprep.subr.bf16.mxu0 0
    %724 = vmatpush1.bf16.msra.mxu0 %v680
    %725 = vmatprep.subr.bf16.mxu0 0
    %726 = vmatpush1.bf16.msra.mxu0 %v679
    %727 = vmatprep.subr.bf16.mxu0 0
    %728 = vmatpush2.bf16.msra.mxu0 %v694
    %729 = vmatprep.subr.bf16.mxu0 0
    %730 = vmatpush2.bf16.msra.mxu0 %v693
    %731 = vmatprep.subr.bf16.mxu0 0
    %732 = vmatpush2.bf16.msra.mxu0 %v692
    %733 = vmatprep.subr.bf16.mxu0 0
    %734 = vmatpush2.bf16.msra.mxu0 %v691
    %735 = vmatprep.subr.bf16.mxu0 0
    %736 = vmatpush2.bf16.msra.mxu0 %v690
    %737 = vmatprep.subr.bf16.mxu0 0
    %738 = vmatpush2.bf16.msra.mxu0 %v689
    %739 = vmatprep.subr.bf16.mxu0 0
    %740 = vmatpush2.bf16.msra.mxu0 %v688
    %741 = vmatprep.subr.bf16.mxu0 0
    %742 = vmatpush2.bf16.msra.mxu0 %v687
    %743 = vmatprep.mubr.bf16.mxu0 %v609
    %744 = vmatmul.mubr.bf16.gmra.mxu0 %v608
    %v745 = vpop.f32.mrf.mxu0
    %v746 = vadd.f32 %v614, %v745
    %v747 = vpop.f32.mrf.mxu0
    %v748 = vpop.f32.mrf.mxu0
    %v749 = vpop.f32.mrf.mxu0
    %750 = vdwg.mxu0
    %v751 = vmax.f32 %v746, 0.0
    %v752 = vld [vmem:[#allocation11] sm:$0x3]
    %v753 = vsel %vm399, %v751, 0.0
    %755 = vrot.lane.b32.xlu0 %v752, 32
    %v756 = vpop.permute.xlu0 %755
    %v758 = vsel %vm399, 0.0, %v756
    %v760 = vrot.slane %v758, 6
    %vm762 = vcmask 1041408
    %v763 = vsel %vm762, %v753, %v760
    %v764 = vld [vmem:[#allocation5] sm:$0xf]
    %v765 = vld [vmem:[#allocation5 + $0x4] sm:$0xf]
    %v766 = vld [vmem:[#allocation5 + $0x8] sm:$0xf]
    %v767 = vld [vmem:[#allocation5 + $0xc] sm:$0xf]
    %v768 = vld [vmem:[#allocation5 + $0x10] sm:$0xf]
    %v769 = vld [vmem:[#allocation5 + $0x14] sm:$0xf]
    %v770 = vld [vmem:[#allocation5 + $0x18] sm:$0xf]
    %v771 = vld [vmem:[#allocation5 + $0x1c] sm:$0xf]
    %v772 = vpack.c.bf16 %v763, %v763
    %v781 = vunpack.c.l.b16 %v764
    %v782 = vunpack.c.l.b16 %v765
    %v783 = vunpack.c.l.b16 %v766
    %v784 = vunpack.c.l.b16 %v767
    %v785 = vunpack.c.l.b16 %v768
    %v786 = vunpack.c.l.b16 %v769
    %v787 = vunpack.c.l.b16 %v770
    %v788 = vunpack.c.l.b16 %v771
    %v789 = vpack.c.b16 %v782, %v781
    %v790 = vpack.c.b16 %v784, %v783
    %v791 = vpack.c.b16 %v786, %v785
    %v792 = vpack.c.b16 %v788, %v787
    %793 = vrot.lane.b32.xlu0 %v789, 96
    %v794 = vpop.permute.xlu0 %793
    %795 = vrot.lane.b32.xlu0 %v790, 96
    %v796 = vpop.permute.xlu0 %795
    %797 = vrot.lane.b32.xlu0 %v791, 96
    %v798 = vpop.permute.xlu0 %797
    %799 = vrot.lane.b32.xlu0 %v792, 96
    %v800 = vpop.permute.xlu0 %799
    %v806 = vsel %vm569, %v772, 0
    %808 = vmatprep.subr.bf16.mxu0 0
    %809 = vmatpush1.bf16.msra.mxu0 0
    %810 = vmatprep.subr.bf16.mxu0 0
    %811 = vmatpush1.bf16.msra.mxu0 0
    %812 = vmatprep.subr.bf16.mxu0 0
    %813 = vmatpush1.bf16.msra.mxu0 0
    %814 = vmatprep.subr.bf16.mxu0 0
    %815 = vmatpush1.bf16.msra.mxu0 0
    %816 = vmatprep.subr.bf16.mxu0 0
    %817 = vmatpush1.bf16.msra.mxu0 %v800
    %818 = vmatprep.subr.bf16.mxu0 0
    %819 = vmatpush1.bf16.msra.mxu0 %v798
    %820 = vmatprep.subr.bf16.mxu0 0
    %821 = vmatpush1.bf16.msra.mxu0 %v796
    %822 = vmatprep.subr.bf16.mxu0 0
    %823 = vmatpush1.bf16.msra.mxu0 %v794
    %824 = vmatprep.subr.bf16.mxu0 0
    %825 = vmatpush2.bf16.msra.mxu0 0
    %826 = vmatprep.subr.bf16.mxu0 0
    %827 = vmatpush2.bf16.msra.mxu0 0
    %828 = vmatprep.subr.bf16.mxu0 0
    %829 = vmatpush2.bf16.msra.mxu0 0
    %830 = vmatprep.subr.bf16.mxu0 0
    %831 = vmatpush2.bf16.msra.mxu0 0
    %832 = vmatprep.subr.bf16.mxu0 0
    %833 = vmatpush2.bf16.msra.mxu0 0
    %834 = vmatprep.subr.bf16.mxu0 0
    %835 = vmatpush2.bf16.msra.mxu0 0
    %836 = vmatprep.subr.bf16.mxu0 0
    %837 = vmatpush2.bf16.msra.mxu0 0
    %838 = vmatprep.subr.bf16.mxu0 0
    %839 = vmatpush2.bf16.msra.mxu0 0
    %840 = vmatprep.mubr.bf16.mxu0 0
    %841 = vmatmul.mubr.bf16.gmra.mxu0 %v806
    %v842 = vpop.f32.mrf.mxu0
    %v843 = vadd.f32 0.0, %v842
    %v844 = vpop.f32.mrf.mxu0
    %v845 = vpop.f32.mrf.mxu0
    %v846 = vpop.f32.mrf.mxu0
    %847 = vdwg.mxu0
    %v848 = vld [vmem:[#allocation7 + $0x3] sm:$0x1]
    %v849 = vlaneseq
    %v850 = vshrl.u32 %v849, 7
    %v851 = vsub.s32 0, %v850
    %v852 = vrot.slane %v848, %v851
    %v853 = vadd.f32 %v843, %v852
    %v854 = vld [vmem:[#allocation7 + $0x4] sm:$0x1]
    %v855 = vlaneseq
    %v856 = vshrl.u32 %v855, 7
    %v857 = vsub.s32 0, %v856
    %v858 = vrot.slane %v854, %v857
    %v859 = vadd.f32 %v843, %v858
    %v861 = vrot.slane %v859, 2
    %v863 = vadd.f32 %v853, %v861
    %v864 = vxor.u32 %v863, 2147483648
    %v865 = vmul.f32 %v864, 1.442695
    %v866 = vpow.pop %v865
    %v867 = vadd.f32 %v866, 1.0
    %v868 = vrcp.pop %v867
    %v869 = vmul.f32 1.0, %v868
    %870 = vrot.lane.b32.xlu0 %v861, 64
    %v871 = vpop.permute.xlu0 %870
    %v873 = vmul.f32 %v869, %v871
    %875 = vrot.lane.b32.xlu0 %v873, 64
    %v876 = vpop.permute.xlu0 %875
    %v878 = vadd.f32 %v853, %v876
    %v879 = vtanh.pop %v878
    %v880 = vsub.f32 1.0, %v869
    %882 = vrot.lane.b32.xlu0 %v879, 96
    %v883 = vpop.permute.xlu0 %882
    %v885 = vmul.f32 %v880, %v883
    %v886 = vmul.f32 %v869, %v756
    %v887 = vadd.f32 %v885, %v886
    %889 = vrot.lane.b32.xlu0 %v887, 96
    %v890 = vpop.permute.xlu0 %889
    %vm892 = vcmask 254976
    %893 = vst.msk [vmem:[#allocation11] sm:$0x3] %vm892, %v890
    %s894 = scalar_lea.vmem [#allocation11], 2
    %v895 = vld [vmem:[%s894] sm:$0x3]
    %v896 = vsel %vm399, %v890, 0.0
    %898 = vrot.lane.b32.xlu0 %v895, 32
    %v899 = vpop.permute.xlu0 %898
    %v901 = vsel %vm399, 0.0, %v899
    %v903 = vrot.slane %v901, 6
    %v905 = vsel %vm762, %v896, %v903
    %v906 = vld [vmem:[#allocation5 + $0x20] sm:$0xf]
    %v907 = vld [vmem:[#allocation5 + $0x24] sm:$0xf]
    %v908 = vld [vmem:[#allocation5 + $0x28] sm:$0xf]
    %v909 = vld [vmem:[#allocation5 + $0x2c] sm:$0xf]
    %v910 = vld [vmem:[#allocation5 + $0x30] sm:$0xf]
    %v911 = vld [vmem:[#allocation5 + $0x34] sm:$0xf]
    %v912 = vld [vmem:[#allocation5 + $0x38] sm:$0xf]
    %v913 = vld [vmem:[#allocation5 + $0x3c] sm:$0xf]
    %v914 = vpack.c.bf16 %v905, %v905
    %v923 = vunpack.c.l.b16 %v906
    %v924 = vunpack.c.l.b16 %v907
    %v925 = vunpack.c.l.b16 %v908
    %v926 = vunpack.c.l.b16 %v909
    %v927 = vunpack.c.l.b16 %v910
    %v928 = vunpack.c.l.b16 %v911
    %v929 = vunpack.c.l.b16 %v912
    %v930 = vunpack.c.l.b16 %v913
    %v931 = vpack.c.b16 %v924, %v923
    %v932 = vpack.c.b16 %v926, %v925
    %v933 = vpack.c.b16 %v928, %v927
    %v934 = vpack.c.b16 %v930, %v929
    %935 = vrot.lane.b32.xlu0 %v931, 96
    %v936 = vpop.permute.xlu0 %935
    %937 = vrot.lane.b32.xlu0 %v932, 96
    %v938 = vpop.permute.xlu0 %937
    %939 = vrot.lane.b32.xlu0 %v933, 96
    %v940 = vpop.permute.xlu0 %939
    %941 = vrot.lane.b32.xlu0 %v934, 96
    %v942 = vpop.permute.xlu0 %941
    %v948 = vsel %vm569, %v914, 0
    %950 = vmatprep.subr.bf16.mxu0 0
    %951 = vmatpush1.bf16.msra.mxu0 0
    %952 = vmatprep.subr.bf16.mxu0 0
    %953 = vmatpush1.bf16.msra.mxu0 0
    %954 = vmatprep.subr.bf16.mxu0 0
    %955 = vmatpush1.bf16.msra.mxu0 0
    %956 = vmatprep.subr.bf16.mxu0 0
    %957 = vmatpush1.bf16.msra.mxu0 0
    %958 = vmatprep.subr.bf16.mxu0 0
    %959 = vmatpush1.bf16.msra.mxu0 %v942
    %960 = vmatprep.subr.bf16.mxu0 0
    %961 = vmatpush1.bf16.msra.mxu0 %v940
    %962 = vmatprep.subr.bf16.mxu0 0
    %963 = vmatpush1.bf16.msra.mxu0 %v938
    %964 = vmatprep.subr.bf16.mxu0 0
    %965 = vmatpush1.bf16.msra.mxu0 %v936
    %966 = vmatprep.subr.bf16.mxu0 0
    %967 = vmatpush2.bf16.msra.mxu0 0
    %968 = vmatprep.subr.bf16.mxu0 0
    %969 = vmatpush2.bf16.msra.mxu0 0
    %970 = vmatprep.subr.bf16.mxu0 0
    %971 = vmatpush2.bf16.msra.mxu0 0
    %972 = vmatprep.subr.bf16.mxu0 0
    %973 = vmatpush2.bf16.msra.mxu0 0
    %974 = vmatprep.subr.bf16.mxu0 0
    %975 = vmatpush2.bf16.msra.mxu0 0
    %976 = vmatprep.subr.bf16.mxu0 0
    %977 = vmatpush2.bf16.msra.mxu0 0
    %978 = vmatprep.subr.bf16.mxu0 0
    %979 = vmatpush2.bf16.msra.mxu0 0
    %980 = vmatprep.subr.bf16.mxu0 0
    %981 = vmatpush2.bf16.msra.mxu0 0
    %982 = vmatprep.mubr.bf16.mxu0 0
    %983 = vmatmul.mubr.bf16.gmra.mxu0 %v948
    %v984 = vpop.f32.mrf.mxu0
    %v985 = vadd.f32 0.0, %v984
    %v986 = vpop.f32.mrf.mxu0
    %v987 = vpop.f32.mrf.mxu0
    %v988 = vpop.f32.mrf.mxu0
    %989 = vdwg.mxu0
    %v990 = vld [vmem:[#allocation7 + $0x5] sm:$0x1]
    %v991 = vlaneseq
    %v992 = vshrl.u32 %v991, 7
    %v993 = vsub.s32 0, %v992
    %v994 = vrot.slane %v990, %v993
    %v995 = vadd.f32 %v985, %v994
    %v996 = vld [vmem:[#allocation7 + $0x6] sm:$0x1]
    %v997 = vlaneseq
    %v998 = vshrl.u32 %v997, 7
    %v999 = vsub.s32 0, %v998
    %v1000 = vrot.slane %v996, %v999
    %v1001 = vadd.f32 %v985, %v1000
    %v1003 = vrot.slane %v1001, 2
    %v1005 = vadd.f32 %v995, %v1003
    %v1006 = vxor.u32 %v1005, 2147483648
    %v1007 = vmul.f32 %v1006, 1.442695
    %v1008 = vpow.pop %v1007
    %v1009 = vadd.f32 %v1008, 1.0
    %v1010 = vrcp.pop %v1009
    %v1011 = vmul.f32 1.0, %v1010
    %1012 = vrot.lane.b32.xlu0 %v1003, 64
    %v1013 = vpop.permute.xlu0 %1012
    %v1015 = vmul.f32 %v1011, %v1013
    %1017 = vrot.lane.b32.xlu0 %v1015, 64
    %v1018 = vpop.permute.xlu0 %1017
    %v1020 = vadd.f32 %v995, %v1018
    %v1021 = vtanh.pop %v1020
    %v1022 = vsub.f32 1.0, %v1011
    %1024 = vrot.lane.b32.xlu0 %v1021, 96
    %v1025 = vpop.permute.xlu0 %1024
    %v1027 = vmul.f32 %v1022, %v1025
    %v1028 = vmul.f32 %v1011, %v899
    %v1029 = vadd.f32 %v1027, %v1028
    %1031 = vrot.lane.b32.xlu0 %v1029, 96
    %v1032 = vpop.permute.xlu0 %1031
    %1034 = vst.msk [vmem:[%s894] sm:$0x3] %vm892, %v1032
    %v1035 = vld [vmem:[#allocation5 + $0x58] sm:$0xf]
    %v1036 = vld [vmem:[#allocation5 + $0x5c] sm:$0xf]
    %v1037 = vld [vmem:[#allocation5 + $0x60] sm:$0xf]
    %v1038 = vld [vmem:[#allocation5 + $0x64] sm:$0xf]
    %v1039 = vpack.c.bf16 %v1029, %v1029
    %v1040 = vld [vmem:[#allocation7 + $0x7] sm:$0x1]
    %v1041 = vlaneseq
    %v1042 = vshrl.u32 %v1041, 7
    %v1043 = vsub.s32 0, %v1042
    %v1044 = vrot.slane %v1040, %v1043
    %1046 = vrot.lane.b32.xlu0 %v1039, 96
    %v1047 = vpop.permute.xlu0 %1046
    %v1052 = vunpack.c.l.b16 %v1035
    %v1053 = vunpack.c.l.b16 %v1036
    %v1054 = vunpack.c.l.b16 %v1037
    %v1055 = vunpack.c.l.b16 %v1038
    %v1056 = vpack.c.b16 %v1053, %v1052
    %v1057 = vpack.c.b16 %v1055, %v1054
    %1058 = vrot.lane.b32.xlu0 %v1056, 96
    %v1059 = vpop.permute.xlu0 %1058
    %1060 = vrot.lane.b32.xlu0 %v1057, 96
    %v1061 = vpop.permute.xlu0 %1060
    %v1065 = vsel %vm399, %v1047, 0
    %1067 = vmatprep.subr.bf16.mxu0 0
    %1068 = vmatpush1.bf16.msra.mxu0 0
    %1069 = vmatprep.subr.bf16.mxu0 0
    %1070 = vmatpush1.bf16.msra.mxu0 0
    %1071 = vmatprep.subr.bf16.mxu0 0
    %1072 = vmatpush1.bf16.msra.mxu0 0
    %1073 = vmatprep.subr.bf16.mxu0 0
    %1074 = vmatpush1.bf16.msra.mxu0 0
    %1075 = vmatprep.subr.bf16.mxu0 0
    %1076 = vmatpush1.bf16.msra.mxu0 0
    %1077 = vmatprep.subr.bf16.mxu0 0
    %1078 = vmatpush1.bf16.msra.mxu0 0
    %1079 = vmatprep.subr.bf16.mxu0 0
    %1080 = vmatpush1.bf16.msra.mxu0 %v1061
    %1081 = vmatprep.subr.bf16.mxu0 0
    %1082 = vmatpush1.bf16.msra.mxu0 %v1059
    %1083 = vmatprep.subr.bf16.mxu0 0
    %1084 = vmatpush2.bf16.msra.mxu0 0
    %1085 = vmatprep.subr.bf16.mxu0 0
    %1086 = vmatpush2.bf16.msra.mxu0 0
    %1087 = vmatprep.subr.bf16.mxu0 0
    %1088 = vmatpush2.bf16.msra.mxu0 0
    %1089 = vmatprep.subr.bf16.mxu0 0
    %1090 = vmatpush2.bf16.msra.mxu0 0
    %1091 = vmatprep.subr.bf16.mxu0 0
    %1092 = vmatpush2.bf16.msra.mxu0 0
    %1093 = vmatprep.subr.bf16.mxu0 0
    %1094 = vmatpush2.bf16.msra.mxu0 0
    %1095 = vmatprep.subr.bf16.mxu0 0
    %1096 = vmatpush2.bf16.msra.mxu0 0
    %1097 = vmatprep.subr.bf16.mxu0 0
    %1098 = vmatpush2.bf16.msra.mxu0 0
    %1099 = vmatprep.mubr.bf16.mxu0 0
    %1100 = vmatmul.mubr.bf16.gmra.mxu0 %v1065
    %v1101 = vpop.f32.mrf.mxu0
    %v1102 = vadd.f32 %v1044, %v1101
    %v1103 = vpop.f32.mrf.mxu0
    %v1104 = vpop.f32.mrf.mxu0
    %v1105 = vpop.f32.mrf.mxu0
    %1106 = vdwg.mxu0
    %vm1107 = vcmask 25600
    %v1108 = vsel %vm1107, %v1102, -inf
    %1109 = vmax.xlane.f32.xlu0 %v1108
    %v1110 = vpop.xlane.xlu0 %1109
    %v1111 = vsub.f32 %v1102, %v1110
    %v1112 = vmul.f32 %v1111, 1.442695
    %v1113 = vpow.pop %v1112
    %v1114 = vsel %vm1107, %v1113, 0.0
    %1115 = vadd.xlane.f32.xlu0 %v1114
    %v1116 = vpop.xlane.xlu0 %1115
    %v1117 = vrcp.pop %v1116
    %v1118 = vmul.f32 %v1113, %v1117
    %1119 = vst.msk [vmem:[#allocation10] sm:$0x3] %vm1107, %v1118
    // Predicated region
    $region38: #{_policy_steps.1} parent=1 // pred_check
      _
    $region39: #{_policy_steps.1} parent=1 // pred_check_branch
      %1121 = sbr.rel (0) target = $region41
    $region40: #{_policy_steps.1} parent=1 // pred_region
      %s1123 = ssub.s32 32, 32
      %1124 = vsyncadd [#allocation4], %s1123
      %s1126 = sshll.u32 [#allocation10], 4
      %s1127 = int_to_ptr.vmem [resolvable:$true] %s1126
      %1129 = dma.vmem_to_hbm [thread:$0]  %s1127, 32, %s4, [#allocation4]
    $region41: #{_policy_steps.1} parent=1 // pred_fallthru
      _
    // Predicated region
    $region42: #{_policy_steps.1} parent=1 // pred_check
      _
    $region43: #{_policy_steps.1} parent=1 // pred_check_branch
      %1131 = sbr.rel (0) target = $region45
    $region44: #{_policy_steps.1} parent=1 // pred_region
      %s1133 = ssub.s32 64, 64
      %1134 = vsyncadd [#allocation12], %s1133
      %s1135 = sshll.u32 [#allocation11], 4
      %s1136 = int_to_ptr.vmem [resolvable:$true] %s1135
      %1141 = dma.vmem_to_hbm [thread:$0]  %s1136, 64, %s5, [#allocation12], 32, 32, 2
    $region45: #{_policy_steps.1} parent=1 // pred_fallthru
      _
    // Predicated region
    $region46: #{_policy_steps.1} parent=1 // pred_check
      _
    $region47: #{_policy_steps.1} parent=1 // pred_check_branch
      %1143 = sbr.rel (0) target = $region49
    $region48: #{_policy_steps.1} parent=1 // pred_region
      %1144 = dma.done [#allocation4], 32
    $region49: #{_policy_steps.1} parent=1 // pred_fallthru
      _
    // Predicated region
    $region50: #{_policy_steps.1} parent=1 // pred_check
      _
    $region51: #{_policy_steps.1} parent=1 // pred_check_branch
      %1146 = sbr.rel (0) target = $region53
    $region52: #{_policy_steps.1} parent=1 // pred_region
      %1147 = dma.done [#allocation12], 64
    $region53: #{_policy_steps.1} parent=1 // pred_fallthru
      _
    %1148 = vsyncpa [#allocation3], 1
    %1149 = vsyncpa [#allocation6], 1
    %1150 = vsyncpa [#allocation9], 1
    %1151 = vsyncpa [#allocation4], 1
    %1152 = vsyncpa [#allocation12], 1

</llo_original>
